<compile_context>
chip_gen: v7x
topology: tpu7x:2x2x1
jax: 0.10.0
libtpu: 0.0.40
codegen_flags: <defaults>
</compile_context>

<pallas_src>
import functools

import jax
import jax.numpy as jnp
from jax.experimental import pallas as pl
from jax.experimental.pallas import tpu as pltpu


def _round_up(x, m):
    return (x + m - 1) // m * m


# ------------------------------------------------------------------
# Pallas kernel 1: tiled matmul + bias + optional fused LeakyReLU(0.2).
# a/w are bf16, accumulation and epilogue are f32.
# ------------------------------------------------------------------
def _matmul_bias_kernel(a_ref, w_ref, b_ref, o_ref, *, act):
    acc = jnp.dot(a_ref[...], w_ref[...], preferred_element_type=jnp.float32)
    acc = acc + b_ref[...]
    if act == "lrelu":
        acc = jnp.where(acc >= 0, acc, 0.2 * acc)
    o_ref[...] = acc.astype(o_ref.dtype)


def _choose_row_tiling(M, Kp, Np, vmem_budget=20 * 1024 * 1024):
    """Pick the largest row tile (multiple of 16) that fits the VMEM budget."""
    Mp = _round_up(M, 16)

    def vmem_bytes(tm):
        # double-buffered A and O tiles + (possibly double-buffered) resident
        # weight tile + bias row.
        return 2 * tm * Kp * 2 + 2 * tm * Np * 4 + 2 * Kp * Np * 2 + Np * 4

    target = 512
    while target > 16 and vmem_bytes(target) > vmem_budget:
        target //= 2
    if Mp <= target:
        return Mp, Mp
    ntiles = -(-Mp // target)
    tm = _round_up(-(-Mp // ntiles), 16)
    return tm, tm * ntiles


def pallas_matmul_bias(a, w, b, act="none"):
    """a: (M, K), w: (K, N), b: (N,) -> (M, N) f32 (bf16 MXU, f32 accumulate)."""
    M, K = a.shape
    Kw, N = w.shape
    assert K == Kw

    Kp = _round_up(K, 16)    # bf16 sublane packing on the weight tile
    Np = _round_up(N, 128)   # lane-dense (unmasked) output stores
    tm, Mp = _choose_row_tiling(M, Kp, Np)

    a_p = jnp.pad(a.astype(jnp.bfloat16), ((0, Mp - M), (0, Kp - K)))
    w_p = jnp.pad(w.astype(jnp.bfloat16), ((0, Kp - K), (0, Np - N)))
    b_p = jnp.pad(b.reshape(1, N).astype(jnp.float32), ((0, 0), (0, Np - N)))

    kernel = functools.partial(_matmul_bias_kernel, act=act)
    cost = pl.CostEstimate(
        flops=2 * Mp * Kp * Np,
        transcendentals=0,
        bytes_accessed=Mp * Kp * 2 + Kp * Np * 2 + Np * 4 + Mp * Np * 4,
    )
    out = pl.pallas_call(
        kernel,
        out_shape=jax.ShapeDtypeStruct((Mp, Np), jnp.float32),
        grid=(Mp // tm,),
        in_specs=[
            pl.BlockSpec((tm, Kp), lambda i: (i, 0)),   # activation row tile
            pl.BlockSpec((Kp, Np), lambda i: (0, 0)),   # weights (resident)
            pl.BlockSpec((1, Np), lambda i: (0, 0)),    # bias (resident)
        ],
        out_specs=pl.BlockSpec((tm, Np), lambda i: (i, 0)),
        compiler_params=pltpu.CompilerParams(
            dimension_semantics=("parallel",),
            vmem_limit_bytes=32 * 1024 * 1024,
        ),
        cost_estimate=cost,
    )(a_p, w_p, b_p)
    return out[:M, :N]


# ------------------------------------------------------------------
# Pallas kernel 2: InstanceNorm2d(affine=False, eps=1e-5) + LeakyReLU(0.2),
# NHWC layout, grid over (sample, channel tile), one-pass f32 statistics.
# ------------------------------------------------------------------
def _instnorm_lrelu_kernel(x_ref, o_ref):
    x = x_ref[...]                                    # (1, L, tc) f32
    inv_l = 1.0 / x.shape[1]
    mean = jnp.sum(x, axis=1, keepdims=True) * inv_l
    var = jnp.maximum(jnp.sum(x * x, axis=1, keepdims=True) * inv_l - mean * mean, 0.0)
    y = (x - mean) * jax.lax.rsqrt(var + 1e-5)
    o_ref[...] = jnp.where(y >= 0, y, 0.2 * y).astype(o_ref.dtype)


def pallas_instancenorm_lrelu_nhwc(x):
    # x: (N, H, W, C) -> normalize over (H, W) per (n, c), then LeakyReLU(0.2)
    N, H, W, C = x.shape
    L = H * W
    xr = x.reshape(N, L, C)
    tc = 128 if C % 128 == 0 else C
    cost = pl.CostEstimate(
        flops=8 * N * L * C,
        transcendentals=N * C,
        bytes_accessed=2 * N * L * C * 4,
    )
    out = pl.pallas_call(
        _instnorm_lrelu_kernel,
        out_shape=jax.ShapeDtypeStruct((N, L, C), jnp.float32),
        grid=(N, C // tc),
        in_specs=[pl.BlockSpec((1, L, tc), lambda n, c: (n, 0, c))],
        out_specs=pl.BlockSpec((1, L, tc), lambda n, c: (n, 0, c)),
        compiler_params=pltpu.CompilerParams(
            dimension_semantics=("parallel", "parallel")),
        cost_estimate=cost,
    )(xr)
    return out.reshape(N, H, W, C)


# ------------------------------------------------------------------
# Pallas kernel 3: fused InstanceNorm + LeakyReLU(0.2) + 1x1 conv (contract3
# norm/act fused with the `final` layer -> saves an HBM round trip of x3).
# ------------------------------------------------------------------
def _instnorm_lrelu_proj_kernel(x_ref, w_ref, b_ref, o_ref):
    x = x_ref[...]                                    # (1, L, C) f32
    inv_l = 1.0 / x.shape[1]
    mean = jnp.sum(x, axis=1, keepdims=True) * inv_l
    var = jnp.maximum(jnp.sum(x * x, axis=1, keepdims=True) * inv_l - mean * mean, 0.0)
    y = (x - mean) * jax.lax.rsqrt(var + 1e-5)
    y = jnp.where(y >= 0, y, 0.2 * y)
    acc = jnp.dot(y[0].astype(jnp.bfloat16), w_ref[...],
                  preferred_element_type=jnp.float32)
    acc = acc + b_ref[...]
    o_ref[...] = acc[None, :, :].astype(o_ref.dtype)


def pallas_instnorm_lrelu_conv1x1_nhwc(x, w, b):
    """x: (N, H, W, C) NHWC f32; w: (Cout, C, 1, 1) PyTorch layout; b: (Cout,)."""
    N, H, W, C = x.shape
    Cout = w.shape[0]
    L = H * W
    Np = _round_up(Cout, 128)
    xr = x.reshape(N, L, C)
    wmat = jnp.pad(w.reshape(Cout, C).T.astype(jnp.bfloat16),
                   ((0, 0), (0, Np - Cout)))
    bp = jnp.pad(b.reshape(1, Cout).astype(jnp.float32), ((0, 0), (0, Np - Cout)))
    cost = pl.CostEstimate(
        flops=2 * N * L * C * Np + 8 * N * L * C,
        transcendentals=N * C,
        bytes_accessed=N * L * C * 4 + C * Np * 2 + N * L * Np * 4,
    )
    out = pl.pallas_call(
        _instnorm_lrelu_proj_kernel,
        out_shape=jax.ShapeDtypeStruct((N, L, Np), jnp.float32),
        grid=(N,),
        in_specs=[
            pl.BlockSpec((1, L, C), lambda n: (n, 0, 0)),
            pl.BlockSpec((C, Np), lambda n: (0, 0)),
            pl.BlockSpec((1, Np), lambda n: (0, 0)),
        ],
        out_specs=pl.BlockSpec((1, L, Np), lambda n: (n, 0, 0)),
        compiler_params=pltpu.CompilerParams(dimension_semantics=("parallel",)),
        cost_estimate=cost,
    )(xr, wmat, bp)
    return out[:, :, :Cout].reshape(N, H, W, Cout)


# ------------------------------------------------------------------
# Conv2d (reflect padding) via NHWC im2col glue + Pallas matmul hot path
# ------------------------------------------------------------------
def conv2d_nhwc(x, w, b, *, stride=1, pad=0, act="none"):
    """x: (N, H, W, Cin) NHWC; w: (Cout, Cin, K, K) PyTorch layout; b: (Cout,)."""
    N, H, W, C = x.shape
    Cout, Cin, K, K2 = w.shape
    assert Cin == C and K == K2

    # Cast to bf16 *before* padding / patch extraction so the im2col slab
    # (the dominant HBM traffic) is half-width.
    xb = x.astype(jnp.bfloat16)
    if pad > 0:
        xb = jnp.pad(xb, ((0, 0), (pad, pad), (pad, pad), (0, 0)), mode="reflect")
    Hp, Wp = H + 2 * pad, W + 2 * pad
    Ho = (Hp - K) // stride + 1
    Wo = (Wp - K) // stride + 1

    if K == 1 and stride == 1:
        cols = xb.reshape(N * Ho * Wo, C)
    else:
        # TODO(synk): fuse patch extraction into the matmul kernel (halo DMA of
        # input row bands) to remove the K*K-fold HBM im2col materialization.
        patches = [
            xb[:, ki : ki + stride * (Ho - 1) + 1 : stride,
                  kj : kj + stride * (Wo - 1) + 1 : stride, :]
            for ki in range(K)
            for kj in range(K)
        ]
        # concat along channels -> (N, Ho, Wo, K*K*C); contraction order (ki, kj, c)
        cols = jnp.concatenate(patches, axis=-1).reshape(N * Ho * Wo, K * K * C)

    # Weight flattened to the same (ki, kj, c) contraction order; lanes = Cout.
    wmat = jnp.transpose(w, (2, 3, 1, 0)).reshape(K * K * C, Cout)
    out = pallas_matmul_bias(cols, wmat, b, act=act)
    return out.reshape(N, Ho, Wo, Cout)


# ------------------------------------------------------------------
# Parameter initialization (deterministic, PyTorch-like kaiming-uniform bounds)
# ------------------------------------------------------------------
def _init_conv(key, cout, cin, k):
    kw, kb = jax.random.split(key)
    fan_in = cin * k * k
    bound = 1.0 / jnp.sqrt(fan_in)
    w = jax.random.uniform(kw, (cout, cin, k, k), jnp.float32, -bound, bound)
    b = jax.random.uniform(kb, (cout,), jnp.float32, -bound, bound)
    return w, b


def init_discriminator_params(key, input_channels, hidden_channels):
    keys = jax.random.split(key, 5)
    params = {}
    params["upfeature"] = _init_conv(keys[0], hidden_channels, input_channels, 7)
    params["contract1"] = _init_conv(keys[1], hidden_channels * 2, hidden_channels, 4)
    params["contract2"] = _init_conv(keys[2], hidden_channels * 4, hidden_channels * 2, 4)
    params["contract3"] = _init_conv(keys[3], hidden_channels * 8, hidden_channels * 4, 4)
    params["final"] = _init_conv(keys[4], 1, hidden_channels * 8, 1)
    return params


# ------------------------------------------------------------------
# Discriminator forward (NCHW in / NCHW out, NHWC internally)
# ------------------------------------------------------------------
def discriminator_forward(params, x):
    xh = jnp.transpose(x, (0, 2, 3, 1))  # NCHW -> NHWC, once

    # upfeature: Conv2d(k=7, pad=3, reflect), no activation
    w, b = params["upfeature"]
    x0 = conv2d_nhwc(xh, w, b, stride=1, pad=3, act="none")

    # contract1: Conv2d(k=4, s=2, pad=1, reflect) -> LeakyReLU(0.2)  (no norm)
    w, b = params["contract1"]
    x1 = conv2d_nhwc(x0, w, b, stride=2, pad=1, act="lrelu")

    # contract2: Conv2d(k=4, s=2, pad=1, reflect) -> InstanceNorm2d -> LeakyReLU(0.2)
    w, b = params["contract2"]
    x2 = conv2d_nhwc(x1, w, b, stride=2, pad=1, act="none")
    x2 = pallas_instancenorm_lrelu_nhwc(x2)

    # contract3 conv: Conv2d(k=4, s=2, pad=1, reflect)
    w, b = params["contract3"]
    x3 = conv2d_nhwc(x2, w, b, stride=2, pad=1, act="none")

    # contract3 InstanceNorm2d + LeakyReLU(0.2) fused with final Conv2d(k=1)
    wf, bf = params["final"]
    xn = pallas_instnorm_lrelu_conv1x1_nhwc(x3, wf, bf)
    return jnp.transpose(xn, (0, 3, 1, 2))  # NHWC -> NCHW, once


if __name__ == "__main__":
    key = jax.random.PRNGKey(0)
    k_param, k_x = jax.random.split(key)

    input_channels = 3
    hidden_channels = 8
    batch, H, W = 2, 16, 16

    params = init_discriminator_params(k_param, input_channels, hidden_channels)
    x = jax.random.normal(k_x, (batch, input_channels, H, W), dtype=jnp.float32)

    out = jax.jit(discriminator_forward)(params, x)
    out = jax.block_until_ready(out)
    assert out.shape == (batch, 1, H // 8, W // 8), out.shape
    assert bool(jnp.all(jnp.isfinite(out)))
    print("KERNEL_OK")
</pallas_src>

<mosaic_0001>
module attributes {stable_mosaic.version = 11 : i64} {
  func.func @_matmul_bias_kernel(%arg0: i32, %arg1: memref<512x160xbf16, #tpu.memory_space<vmem>>, %arg2: memref<160x128xbf16, #tpu.memory_space<vmem>>, %arg3: memref<1x128xf32, #tpu.memory_space<vmem>>, %arg4: memref<512x128xf32, #tpu.memory_space<vmem>>) attributes {dimension_semantics = [#tpu.dimension_semantics<parallel>], iteration_bounds = array<i64: 1>, scalar_prefetch = 0 : i64, scratch_operands = 0 : i64, tpu.core_type = #tpu.core_type<tc>, window_params = [{transform_indices = @transform_0, window_bounds = array<i64: 512, 160>}, {pipeline_mode = #tpu.pipeline_mode<synchronous>, transform_indices = @transform_1, window_bounds = array<i64: 160, 128>}, {pipeline_mode = #tpu.pipeline_mode<synchronous>, transform_indices = @transform_2, window_bounds = array<i64: 1, 128>}, {transform_indices = @transform_3, window_bounds = array<i64: 512, 128>}]} {
    %c0 = arith.constant 0 : index
    %c0_0 = arith.constant 0 : index
    %0 = vector.load %arg1[%c0, %c0_0] : memref<512x160xbf16, #tpu.memory_space<vmem>>, vector<512x160xbf16>
    %c0_1 = arith.constant 0 : index
    %c0_2 = arith.constant 0 : index
    %1 = vector.load %arg2[%c0_1, %c0_2] : memref<160x128xbf16, #tpu.memory_space<vmem>>, vector<160x128xbf16>
    %cst = arith.constant dense<0.000000e+00> : vector<512x128xf32>
    %2 = tpu.matmul %0, %1, %cst {dimension_numbers = #tpu.dot_dimension_numbers<[1], [0], [0], [1], [0, 0, 1, 1], [], []>} : vector<512x160xbf16>, vector<160x128xbf16>, vector<512x128xf32> -> vector<512x128xf32>
    %c0_3 = arith.constant 0 : index
    %c0_4 = arith.constant 0 : index
    %3 = vector.load %arg3[%c0_3, %c0_4] : memref<1x128xf32, #tpu.memory_space<vmem>>, vector<1x128xf32>
    %4 = vector.broadcast %3 : vector<1x128xf32> to vector<512x128xf32>
    %5 = arith.addf %2, %4 : vector<512x128xf32>
    %c0_5 = arith.constant 0 : index
    %c0_6 = arith.constant 0 : index
    %6 = vector.load %arg4[%c0_5, %c0_6] : memref<512x128xf32, #tpu.memory_space<vmem>>, vector<512x128xf32>
    tpu.vector_store %arg4[%c0_5, %c0_6], %5 {strides = array<i32>} : memref<512x128xf32, #tpu.memory_space<vmem>>, vector<512x128xf32>,
    return
  }
  func.func @transform_0(%arg0: i32) -> (i32, i32) {
    %c0_i32 = arith.constant 0 : i32
    %c0_i32_0 = arith.constant 0 : i32
    return %arg0, %c0_i32 : i32, i32
  }
  func.func @transform_1(%arg0: i32) -> (i32, i32) {
    %c0_i32 = arith.constant 0 : i32
    %c0_i32_0 = arith.constant 0 : i32
    %c0_i32_1 = arith.constant 0 : i32
    return %c0_i32, %c0_i32_0 : i32, i32
  }
  func.func @transform_2(%arg0: i32) -> (i32, i32) {
    %c0_i32 = arith.constant 0 : i32
    %c0_i32_0 = arith.constant 0 : i32
    %c0_i32_1 = arith.constant 0 : i32
    return %c0_i32, %c0_i32_0 : i32, i32
  }
  func.func @transform_3(%arg0: i32) -> (i32, i32) {
    %c0_i32 = arith.constant 0 : i32
    %c0_i32_0 = arith.constant 0 : i32
    return %arg0, %c0_i32 : i32, i32
  }
}

module attributes {stable_mosaic.version = 11 : i64} {
  func.func @_matmul_bias_kernel(%arg0: i32, %arg1: memref<128x128xbf16, #tpu.memory_space<vmem>>, %arg2: memref<128x128xbf16, #tpu.memory_space<vmem>>, %arg3: memref<1x128xf32, #tpu.memory_space<vmem>>, %arg4: memref<128x128xf32, #tpu.memory_space<vmem>>) attributes {dimension_semantics = [#tpu.dimension_semantics<parallel>], iteration_bounds = array<i64: 1>, scalar_prefetch = 0 : i64, scratch_operands = 0 : i64, tpu.core_type = #tpu.core_type<tc>, window_params = [{transform_indices = @transform_0, window_bounds = array<i64: 128, 128>}, {pipeline_mode = #tpu.pipeline_mode<synchronous>, transform_indices = @transform_1, window_bounds = array<i64: 128, 128>}, {pipeline_mode = #tpu.pipeline_mode<synchronous>, transform_indices = @transform_2, window_bounds = array<i64: 1, 128>}, {transform_indices = @transform_3, window_bounds = array<i64: 128, 128>}]} {
    %c0 = arith.constant 0 : index
    %c0_0 = arith.constant 0 : index
    %0 = vector.load %arg1[%c0, %c0_0] : memref<128x128xbf16, #tpu.memory_space<vmem>>, vector<128x128xbf16>
    %c0_1 = arith.constant 0 : index
    %c0_2 = arith.constant 0 : index
    %1 = vector.load %arg2[%c0_1, %c0_2] : memref<128x128xbf16, #tpu.memory_space<vmem>>, vector<128x128xbf16>
    %cst = arith.constant dense<0.000000e+00> : vector<128x128xf32>
    %2 = tpu.matmul %0, %1, %cst {dimension_numbers = #tpu.dot_dimension_numbers<[1], [0], [0], [1], [0, 0, 1, 1], [], []>} : vector<128x128xbf16>, vector<128x128xbf16>, vector<128x128xf32> -> vector<128x128xf32>
    %c0_3 = arith.constant 0 : index
    %c0_4 = arith.constant 0 : index
    %3 = vector.load %arg3[%c0_3, %c0_4] : memref<1x128xf32, #tpu.memory_space<vmem>>, vector<1x128xf32>
    %4 = vector.broadcast %3 : vector<1x128xf32> to vector<128x128xf32>
    %5 = arith.addf %2, %4 : vector<128x128xf32>
    %cst_5 = arith.constant 0.000000e+00 : f32
    %6 = vector.broadcast %cst_5 : f32 to vector<128x128xf32>
    %7 = arith.cmpf oge, %5, %6 : vector<128x128xf32>
    %cst_6 = arith.constant 2.000000e-01 : f32
    %8 = vector.broadcast %cst_6 : f32 to vector<128x128xf32>
    %9 = arith.mulf %8, %5 : vector<128x128xf32>
    %10 = arith.select %7, %5, %9 : vector<128x128xi1>, vector<128x128xf32>
    %c0_7 = arith.constant 0 : index
    %c0_8 = arith.constant 0 : index
    %11 = vector.load %arg4[%c0_7, %c0_8] : memref<128x128xf32, #tpu.memory_space<vmem>>, vector<128x128xf32>
    tpu.vector_store %arg4[%c0_7, %c0_8], %10 {strides = array<i32>} : memref<128x128xf32, #tpu.memory_space<vmem>>, vector<128x128xf32>,
    return
  }
  func.func @transform_0(%arg0: i32) -> (i32, i32) {
    %c0_i32 = arith.constant 0 : i32
    %c0_i32_0 = arith.constant 0 : i32
    return %arg0, %c0_i32 : i32, i32
  }
  func.func @transform_1(%arg0: i32) -> (i32, i32) {
    %c0_i32 = arith.constant 0 : i32
    %c0_i32_0 = arith.constant 0 : i32
    %c0_i32_1 = arith.constant 0 : i32
    return %c0_i32, %c0_i32_0 : i32, i32
  }
  func.func @transform_2(%arg0: i32) -> (i32, i32) {
    %c0_i32 = arith.constant 0 : i32
    %c0_i32_0 = arith.constant 0 : i32
    %c0_i32_1 = arith.constant 0 : i32
    return %c0_i32, %c0_i32_0 : i32, i32
  }
  func.func @transform_3(%arg0: i32) -> (i32, i32) {
    %c0_i32 = arith.constant 0 : i32
    %c0_i32_0 = arith.constant 0 : i32
    return %arg0, %c0_i32 : i32, i32
  }
}

module attributes {stable_mosaic.version = 11 : i64} {
  func.func @_instnorm_lrelu_kernel(%arg0: i32, %arg1: i32, %arg2: memref<1x16x32xf32, #tpu.memory_space<vmem>>, %arg3: memref<1x16x32xf32, #tpu.memory_space<vmem>>) attributes {dimension_semantics = [#tpu.dimension_semantics<parallel>, #tpu.dimension_semantics<parallel>], iteration_bounds = array<i64: 2, 1>, scalar_prefetch = 0 : i64, scratch_operands = 0 : i64, tpu.core_type = #tpu.core_type<tc>, window_params = [{transform_indices = @transform_0, window_bounds = array<i64: 1, 16, 32>}, {transform_indices = @transform_1, window_bounds = array<i64: 1, 16, 32>}]} {
    %c0 = arith.constant 0 : index
    %c0_0 = arith.constant 0 : index
    %c0_1 = arith.constant 0 : index
    %0 = vector.load %arg2[%c0, %c0_0, %c0_1] : memref<1x16x32xf32, #tpu.memory_space<vmem>>, vector<1x16x32xf32>
    %cst = arith.constant dense<0.000000e+00> : vector<1x32xf32>
    %1 = vector.multi_reduction <add>, %0, %cst [1] : vector<1x16x32xf32> to vector<1x32xf32>
    %2 = vector.shape_cast %1 : vector<1x32xf32> to vector<1x1x32xf32>
    %cst_2 = arith.constant 6.250000e-02 : f32
    %3 = vector.broadcast %cst_2 : f32 to vector<1x1x32xf32>
    %4 = arith.mulf %2, %3 : vector<1x1x32xf32>
    %5 = arith.mulf %0, %0 : vector<1x16x32xf32>
    %cst_3 = arith.constant dense<0.000000e+00> : vector<1x32xf32>
    %6 = vector.multi_reduction <add>, %5, %cst_3 [1] : vector<1x16x32xf32> to vector<1x32xf32>
    %7 = vector.shape_cast %6 : vector<1x32xf32> to vector<1x1x32xf32>
    %cst_4 = arith.constant 6.250000e-02 : f32
    %8 = vector.broadcast %cst_4 : f32 to vector<1x1x32xf32>
    %9 = arith.mulf %7, %8 : vector<1x1x32xf32>
    %10 = arith.mulf %4, %4 : vector<1x1x32xf32>
    %11 = arith.subf %9, %10 : vector<1x1x32xf32>
    %cst_5 = arith.constant 0.000000e+00 : f32
    %12 = vector.broadcast %cst_5 : f32 to vector<1x1x32xf32>
    %13 = arith.maximumf %11, %12 : vector<1x1x32xf32>
    %14 = vector.broadcast %4 : vector<1x1x32xf32> to vector<1x16x32xf32>
    %15 = arith.subf %0, %14 : vector<1x16x32xf32>
    %cst_6 = arith.constant 9.99999974E-6 : f32
    %16 = vector.broadcast %cst_6 : f32 to vector<1x1x32xf32>
    %17 = arith.addf %13, %16 : vector<1x1x32xf32>
    %18 = math.rsqrt %17 : vector<1x1x32xf32>
    %19 = vector.broadcast %18 : vector<1x1x32xf32> to vector<1x16x32xf32>
    %20 = arith.mulf %15, %19 : vector<1x16x32xf32>
    %cst_7 = arith.constant 0.000000e+00 : f32
    %21 = vector.broadcast %cst_7 : f32 to vector<1x16x32xf32>
    %22 = arith.cmpf oge, %20, %21 : vector<1x16x32xf32>
    %cst_8 = arith.constant 2.000000e-01 : f32
    %23 = vector.broadcast %cst_8 : f32 to vector<1x16x32xf32>
    %24 = arith.mulf %23, %20 : vector<1x16x32xf32>
    %25 = arith.select %22, %20, %24 : vector<1x16x32xi1>, vector<1x16x32xf32>
    %c0_9 = arith.constant 0 : index
    %c0_10 = arith.constant 0 : index
    %c0_11 = arith.constant 0 : index
    %26 = vector.load %arg3[%c0_9, %c0_10, %c0_11] : memref<1x16x32xf32, #tpu.memory_space<vmem>>, vector<1x16x32xf32>
    tpu.vector_store %arg3[%c0_9, %c0_10, %c0_11], %25 {strides = array<i32>} : memref<1x16x32xf32, #tpu.memory_space<vmem>>, vector<1x16x32xf32>,
    return
  }
  func.func @transform_0(%arg0: i32, %arg1: i32) -> (i32, i32, i32) {
    %c0_i32 = arith.constant 0 : i32
    %c0_i32_0 = arith.constant 0 : i32
    return %arg0, %c0_i32, %arg1 : i32, i32, i32
  }
  func.func @transform_1(%arg0: i32, %arg1: i32) -> (i32, i32, i32) {
    %c0_i32 = arith.constant 0 : i32
    %c0_i32_0 = arith.constant 0 : i32
    return %arg0, %c0_i32, %arg1 : i32, i32, i32
  }
}

module attributes {stable_mosaic.version = 11 : i64} {
  func.func @_matmul_bias_kernel(%arg0: i32, %arg1: memref<32x256xbf16, #tpu.memory_space<vmem>>, %arg2: memref<256x128xbf16, #tpu.memory_space<vmem>>, %arg3: memref<1x128xf32, #tpu.memory_space<vmem>>, %arg4: memref<32x128xf32, #tpu.memory_space<vmem>>) attributes {dimension_semantics = [#tpu.dimension_semantics<parallel>], iteration_bounds = array<i64: 1>, scalar_prefetch = 0 : i64, scratch_operands = 0 : i64, tpu.core_type = #tpu.core_type<tc>, window_params = [{transform_indices = @transform_0, window_bounds = array<i64: 32, 256>}, {pipeline_mode = #tpu.pipeline_mode<synchronous>, transform_indices = @transform_1, window_bounds = array<i64: 256, 128>}, {pipeline_mode = #tpu.pipeline_mode<synchronous>, transform_indices = @transform_2, window_bounds = array<i64: 1, 128>}, {transform_indices = @transform_3, window_bounds = array<i64: 32, 128>}]} {
    %c0 = arith.constant 0 : index
    %c0_0 = arith.constant 0 : index
    %0 = vector.load %arg1[%c0, %c0_0] : memref<32x256xbf16, #tpu.memory_space<vmem>>, vector<32x256xbf16>
    %c0_1 = arith.constant 0 : index
    %c0_2 = arith.constant 0 : index
    %1 = vector.load %arg2[%c0_1, %c0_2] : memref<256x128xbf16, #tpu.memory_space<vmem>>, vector<256x128xbf16>
    %cst = arith.constant dense<0.000000e+00> : vector<32x128xf32>
    %2 = tpu.matmul %0, %1, %cst {dimension_numbers = #tpu.dot_dimension_numbers<[1], [0], [0], [1], [0, 0, 1, 1], [], []>} : vector<32x256xbf16>, vector<256x128xbf16>, vector<32x128xf32> -> vector<32x128xf32>
    %c0_3 = arith.constant 0 : index
    %c0_4 = arith.constant 0 : index
    %3 = vector.load %arg3[%c0_3, %c0_4] : memref<1x128xf32, #tpu.memory_space<vmem>>, vector<1x128xf32>
    %4 = vector.broadcast %3 : vector<1x128xf32> to vector<32x128xf32>
    %5 = arith.addf %2, %4 : vector<32x128xf32>
    %c0_5 = arith.constant 0 : index
    %c0_6 = arith.constant 0 : index
    %6 = vector.load %arg4[%c0_5, %c0_6] : memref<32x128xf32, #tpu.memory_space<vmem>>, vector<32x128xf32>
    tpu.vector_store %arg4[%c0_5, %c0_6], %5 {strides = array<i32>} : memref<32x128xf32, #tpu.memory_space<vmem>>, vector<32x128xf32>,
    return
  }
  func.func @transform_0(%arg0: i32) -> (i32, i32) {
    %c0_i32 = arith.constant 0 : i32
    %c0_i32_0 = arith.constant 0 : i32
    return %arg0, %c0_i32 : i32, i32
  }
  func.func @transform_1(%arg0: i32) -> (i32, i32) {
    %c0_i32 = arith.constant 0 : i32
    %c0_i32_0 = arith.constant 0 : i32
    %c0_i32_1 = arith.constant 0 : i32
    return %c0_i32, %c0_i32_0 : i32, i32
  }
  func.func @transform_2(%arg0: i32) -> (i32, i32) {
    %c0_i32 = arith.constant 0 : i32
    %c0_i32_0 = arith.constant 0 : i32
    %c0_i32_1 = arith.constant 0 : i32
    return %c0_i32, %c0_i32_0 : i32, i32
  }
  func.func @transform_3(%arg0: i32) -> (i32, i32) {
    %c0_i32 = arith.constant 0 : i32
    %c0_i32_0 = arith.constant 0 : i32
    return %arg0, %c0_i32 : i32, i32
  }
}

module attributes {stable_mosaic.version = 11 : i64} {
  func.func @_instnorm_lrelu_proj_kernel(%arg0: i32, %arg1: memref<1x4x64xf32, #tpu.memory_space<vmem>>, %arg2: memref<64x128xbf16, #tpu.memory_space<vmem>>, %arg3: memref<1x128xf32, #tpu.memory_space<vmem>>, %arg4: memref<1x4x128xf32, #tpu.memory_space<vmem>>) attributes {dimension_semantics = [#tpu.dimension_semantics<parallel>], iteration_bounds = array<i64: 2>, scalar_prefetch = 0 : i64, scratch_operands = 0 : i64, tpu.core_type = #tpu.core_type<tc>, window_params = [{transform_indices = @transform_0, window_bounds = array<i64: 1, 4, 64>}, {pipeline_mode = #tpu.pipeline_mode<synchronous>, transform_indices = @transform_1, window_bounds = array<i64: 64, 128>}, {pipeline_mode = #tpu.pipeline_mode<synchronous>, transform_indices = @transform_2, window_bounds = array<i64: 1, 128>}, {transform_indices = @transform_3, window_bounds = array<i64: 1, 4, 128>}]} {
    %c0 = arith.constant 0 : index
    %c0_0 = arith.constant 0 : index
    %c0_1 = arith.constant 0 : index
    %0 = vector.load %arg1[%c0, %c0_0, %c0_1] : memref<1x4x64xf32, #tpu.memory_space<vmem>>, vector<1x4x64xf32>
    %cst = arith.constant dense<0.000000e+00> : vector<1x64xf32>
    %1 = vector.multi_reduction <add>, %0, %cst [1] : vector<1x4x64xf32> to vector<1x64xf32>
    %2 = vector.shape_cast %1 : vector<1x64xf32> to vector<1x1x64xf32>
    %cst_2 = arith.constant 2.500000e-01 : f32
    %3 = vector.broadcast %cst_2 : f32 to vector<1x1x64xf32>
    %4 = arith.mulf %2, %3 : vector<1x1x64xf32>
    %5 = arith.mulf %0, %0 : vector<1x4x64xf32>
    %cst_3 = arith.constant dense<0.000000e+00> : vector<1x64xf32>
    %6 = vector.multi_reduction <add>, %5, %cst_3 [1] : vector<1x4x64xf32> to vector<1x64xf32>
    %7 = vector.shape_cast %6 : vector<1x64xf32> to vector<1x1x64xf32>
    %cst_4 = arith.constant 2.500000e-01 : f32
    %8 = vector.broadcast %cst_4 : f32 to vector<1x1x64xf32>
    %9 = arith.mulf %7, %8 : vector<1x1x64xf32>
    %10 = arith.mulf %4, %4 : vector<1x1x64xf32>
    %11 = arith.subf %9, %10 : vector<1x1x64xf32>
    %cst_5 = arith.constant 0.000000e+00 : f32
    %12 = vector.broadcast %cst_5 : f32 to vector<1x1x64xf32>
    %13 = arith.maximumf %11, %12 : vector<1x1x64xf32>
    %14 = vector.broadcast %4 : vector<1x1x64xf32> to vector<1x4x64xf32>
    %15 = arith.subf %0, %14 : vector<1x4x64xf32>
    %cst_6 = arith.constant 9.99999974E-6 : f32
    %16 = vector.broadcast %cst_6 : f32 to vector<1x1x64xf32>
    %17 = arith.addf %13, %16 : vector<1x1x64xf32>
    %18 = math.rsqrt %17 : vector<1x1x64xf32>
    %19 = vector.broadcast %18 : vector<1x1x64xf32> to vector<1x4x64xf32>
    %20 = arith.mulf %15, %19 : vector<1x4x64xf32>
    %cst_7 = arith.constant 0.000000e+00 : f32
    %21 = vector.broadcast %cst_7 : f32 to vector<1x4x64xf32>
    %22 = arith.cmpf oge, %20, %21 : vector<1x4x64xf32>
    %cst_8 = arith.constant 2.000000e-01 : f32
    %23 = vector.broadcast %cst_8 : f32 to vector<1x4x64xf32>
    %24 = arith.mulf %23, %20 : vector<1x4x64xf32>
    %25 = arith.select %22, %20, %24 : vector<1x4x64xi1>, vector<1x4x64xf32>
    %26 = vector.shape_cast %25 : vector<1x4x64xf32> to vector<4x64xf32>
    %27 = arith.truncf %26 : vector<4x64xf32> to vector<4x64xbf16>
    %c0_9 = arith.constant 0 : index
    %c0_10 = arith.constant 0 : index
    %28 = vector.load %arg2[%c0_9, %c0_10] : memref<64x128xbf16, #tpu.memory_space<vmem>>, vector<64x128xbf16>
    %cst_11 = arith.constant dense<0.000000e+00> : vector<4x128xf32>
    %29 = tpu.matmul %27, %28, %cst_11 {dimension_numbers = #tpu.dot_dimension_numbers<[1], [0], [0], [1], [0, 0, 1, 1], [], []>} : vector<4x64xbf16>, vector<64x128xbf16>, vector<4x128xf32> -> vector<4x128xf32>
    %c0_12 = arith.constant 0 : index
    %c0_13 = arith.constant 0 : index
    %30 = vector.load %arg3[%c0_12, %c0_13] : memref<1x128xf32, #tpu.memory_space<vmem>>, vector<1x128xf32>
    %31 = vector.broadcast %30 : vector<1x128xf32> to vector<4x128xf32>
    %32 = arith.addf %29, %31 : vector<4x128xf32>
    %33 = vector.shape_cast %32 : vector<4x128xf32> to vector<1x4x128xf32>
    %c0_14 = arith.constant 0 : index
    %c0_15 = arith.constant 0 : index
    %c0_16 = arith.constant 0 : index
    %34 = vector.load %arg4[%c0_14, %c0_15, %c0_16] : memref<1x4x128xf32, #tpu.memory_space<vmem>>, vector<1x4x128xf32>
    tpu.vector_store %arg4[%c0_14, %c0_15, %c0_16], %33 {strides = array<i32>} : memref<1x4x128xf32, #tpu.memory_space<vmem>>, vector<1x4x128xf32>,
    return
  }
  func.func @transform_0(%arg0: i32) -> (i32, i32, i32) {
    %c0_i32 = arith.constant 0 : i32
    %c0_i32_0 = arith.constant 0 : i32
    %c0_i32_1 = arith.constant 0 : i32
    return %arg0, %c0_i32, %c0_i32_0 : i32, i32, i32
  }
  func.func @transform_1(%arg0: i32) -> (i32, i32) {
    %c0_i32 = arith.constant 0 : i32
    %c0_i32_0 = arith.constant 0 : i32
    %c0_i32_1 = arith.constant 0 : i32
    return %c0_i32, %c0_i32_0 : i32, i32
  }
  func.func @transform_2(%arg0: i32) -> (i32, i32) {
    %c0_i32 = arith.constant 0 : i32
    %c0_i32_0 = arith.constant 0 : i32
    %c0_i32_1 = arith.constant 0 : i32
    return %c0_i32, %c0_i32_0 : i32, i32
  }
  func.func @transform_3(%arg0: i32) -> (i32, i32, i32) {
    %c0_i32 = arith.constant 0 : i32
    %c0_i32_0 = arith.constant 0 : i32
    %c0_i32_1 = arith.constant 0 : i32
    return %arg0, %c0_i32, %c0_i32_0 : i32, i32, i32
  }
}

module attributes {stable_mosaic.version = 11 : i64} {
  func.func @_matmul_bias_kernel(%arg0: i32, %arg1: memref<16x512xbf16, #tpu.memory_space<vmem>>, %arg2: memref<512x128xbf16, #tpu.memory_space<vmem>>, %arg3: memref<1x128xf32, #tpu.memory_space<vmem>>, %arg4: memref<16x128xf32, #tpu.memory_space<vmem>>) attributes {dimension_semantics = [#tpu.dimension_semantics<parallel>], iteration_bounds = array<i64: 1>, scalar_prefetch = 0 : i64, scratch_operands = 0 : i64, tpu.core_type = #tpu.core_type<tc>, window_params = [{transform_indices = @transform_0, window_bounds = array<i64: 16, 512>}, {pipeline_mode = #tpu.pipeline_mode<synchronous>, transform_indices = @transform_1, window_bounds = array<i64: 512, 128>}, {pipeline_mode = #tpu.pipeline_mode<synchronous>, transform_indices = @transform_2, window_bounds = array<i64: 1, 128>}, {transform_indices = @transform_3, window_bounds = array<i64: 16, 128>}]} {
    %c0 = arith.constant 0 : index
    %c0_0 = arith.constant 0 : index
    %0 = vector.load %arg1[%c0, %c0_0] : memref<16x512xbf16, #tpu.memory_space<vmem>>, vector<16x512xbf16>
    %c0_1 = arith.constant 0 : index
    %c0_2 = arith.constant 0 : index
    %1 = vector.load %arg2[%c0_1, %c0_2] : memref<512x128xbf16, #tpu.memory_space<vmem>>, vector<512x128xbf16>
    %cst = arith.constant dense<0.000000e+00> : vector<16x128xf32>
    %2 = tpu.matmul %0, %1, %cst {dimension_numbers = #tpu.dot_dimension_numbers<[1], [0], [0], [1], [0, 0, 1, 1], [], []>} : vector<16x512xbf16>, vector<512x128xbf16>, vector<16x128xf32> -> vector<16x128xf32>
    %c0_3 = arith.constant 0 : index
    %c0_4 = arith.constant 0 : index
    %3 = vector.load %arg3[%c0_3, %c0_4] : memref<1x128xf32, #tpu.memory_space<vmem>>, vector<1x128xf32>
    %4 = vector.broadcast %3 : vector<1x128xf32> to vector<16x128xf32>
    %5 = arith.addf %2, %4 : vector<16x128xf32>
    %c0_5 = arith.constant 0 : index
    %c0_6 = arith.constant 0 : index
    %6 = vector.load %arg4[%c0_5, %c0_6] : memref<16x128xf32, #tpu.memory_space<vmem>>, vector<16x128xf32>
    tpu.vector_store %arg4[%c0_5, %c0_6], %5 {strides = array<i32>} : memref<16x128xf32, #tpu.memory_space<vmem>>, vector<16x128xf32>,
    return
  }
  func.func @transform_0(%arg0: i32) -> (i32, i32) {
    %c0_i32 = arith.constant 0 : i32
    %c0_i32_0 = arith.constant 0 : i32
    return %arg0, %c0_i32 : i32, i32
  }
  func.func @transform_1(%arg0: i32) -> (i32, i32) {
    %c0_i32 = arith.constant 0 : i32
    %c0_i32_0 = arith.constant 0 : i32
    %c0_i32_1 = arith.constant 0 : i32
    return %c0_i32, %c0_i32_0 : i32, i32
  }
  func.func @transform_2(%arg0: i32) -> (i32, i32) {
    %c0_i32 = arith.constant 0 : i32
    %c0_i32_0 = arith.constant 0 : i32
    %c0_i32_1 = arith.constant 0 : i32
    return %c0_i32, %c0_i32_0 : i32, i32
  }
  func.func @transform_3(%arg0: i32) -> (i32, i32) {
    %c0_i32 = arith.constant 0 : i32
    %c0_i32_0 = arith.constant 0 : i32
    return %arg0, %c0_i32 : i32, i32
  }
}

</mosaic_0001>

<llo_original>
// kernel: discriminator_forward.6
$region0: #{discriminator_forward.6}
  #allocation0 [shape = 'u32[]', space=smem, size = 0x4, offset = 0x4, fixed_abs, tag = 'smem constant byte address 0x4 - core index']
  #allocation1 [shape = 'u32[144,128]{1,0:T(1,128)}', space=vmem, size = 0x12000, scoped, tag = 'internal scratch']
  %s0 = inlined_call_operand.vmem [shape: bf16[512,160], index: 0, kind: input, shape index: {}]
  %s1 = inlined_call_operand.vmem [shape: bf16[160,128], index: 1, kind: input, shape index: {}]
  %s2 = inlined_call_operand.vmem [shape: f32[1,128], index: 2, kind: input, shape index: {}]
  %s3 = inlined_call_operand.vmem [shape: f32[512,128], index: 3, kind: output, shape index: {}]
  %s4 = sld [smem:[#allocation0]]
  $region22: #{discriminator_forward.6} parent=0
    _
  %s6 = ssub.s32 1, %s4
  %s7 = scalar_select 0, %s6, %s4
  // Predicated region
  $region2: #{discriminator_forward.6} parent=0 // pred_check
    _
  $region3: #{discriminator_forward.6} parent=0 // pred_check_branch
    %9 = sbr.rel (0) target = $region5
  $region4: #{discriminator_forward.6} parent=0 // pred_region
    _
  $region5: #{discriminator_forward.6} parent=0 // pred_fallthru
    _
  // Predicated region
  $region6: #{discriminator_forward.6} parent=0 // pred_check
    _
  $region7: #{discriminator_forward.6} parent=0 // pred_check_branch
    %11 = sbr.rel (0) target = $region9
  $region8: #{discriminator_forward.6} parent=0 // pred_region
    _
  $region9: #{discriminator_forward.6} parent=0 // pred_fallthru
    _
  // Predicated region
  $region10: #{discriminator_forward.6} parent=0 // pred_check
    _
  $region11: #{discriminator_forward.6} parent=0 // pred_check_branch
    %13 = sbr.rel (0) target = $region13
  $region12: #{discriminator_forward.6} parent=0 // pred_region
    _
  $region13: #{discriminator_forward.6} parent=0 // pred_fallthru
    _
  %v15 = vld [vmem:[%s0] sm:$0xff]
  %v16 = vld [vmem:[%s0 + $0x8] sm:$0xff]
  %v17 = vld [vmem:[%s0 + $0x10] sm:$0xff]
  %v18 = vld [vmem:[%s0 + $0x18] sm:$0xff]
  %v19 = vld [vmem:[%s0 + $0x20] sm:$0xff]
  %v20 = vld [vmem:[%s0 + $0x28] sm:$0xff]
  %v21 = vld [vmem:[%s0 + $0x30] sm:$0xff]
  %v22 = vld [vmem:[%s0 + $0x38] sm:$0xff]
  %v23 = vld [vmem:[%s0 + $0x40] sm:$0xff]
  %v24 = vld [vmem:[%s0 + $0x48] sm:$0xff]
  %v25 = vld [vmem:[%s0 + $0x50] sm:$0xff]
  %v26 = vld [vmem:[%s0 + $0x58] sm:$0xff]
  %v27 = vld [vmem:[%s0 + $0x60] sm:$0xff]
  %v28 = vld [vmem:[%s0 + $0x68] sm:$0xff]
  %v29 = vld [vmem:[%s0 + $0x70] sm:$0xff]
  %v30 = vld [vmem:[%s0 + $0x78] sm:$0xff]
  %v31 = vld [vmem:[%s0 + $0x80] sm:$0xff]
  %v32 = vld [vmem:[%s0 + $0x88] sm:$0xff]
  %v33 = vld [vmem:[%s0 + $0x90] sm:$0xff]
  %v34 = vld [vmem:[%s0 + $0x98] sm:$0xff]
  %v35 = vld [vmem:[%s0 + $0xa0] sm:$0xff]
  %v36 = vld [vmem:[%s0 + $0xa8] sm:$0xff]
  %v37 = vld [vmem:[%s0 + $0xb0] sm:$0xff]
  %v38 = vld [vmem:[%s0 + $0xb8] sm:$0xff]
  %v39 = vld [vmem:[%s0 + $0xc0] sm:$0xff]
  %v40 = vld [vmem:[%s0 + $0xc8] sm:$0xff]
  %v41 = vld [vmem:[%s0 + $0xd0] sm:$0xff]
  %v42 = vld [vmem:[%s0 + $0xd8] sm:$0xff]
  %v43 = vld [vmem:[%s0 + $0xe0] sm:$0xff]
  %v44 = vld [vmem:[%s0 + $0xe8] sm:$0xff]
  %v45 = vld [vmem:[%s0 + $0xf0] sm:$0xff]
  %v46 = vld [vmem:[%s0 + $0xf8] sm:$0xff]
  %v47 = vld [vmem:[%s0 + $0x100] sm:$0xff]
  %v48 = vld [vmem:[%s0 + $0x108] sm:$0xff]
  %v49 = vld [vmem:[%s0 + $0x110] sm:$0xff]
  %v50 = vld [vmem:[%s0 + $0x118] sm:$0xff]
  %v51 = vld [vmem:[%s0 + $0x120] sm:$0xff]
  %v52 = vld [vmem:[%s0 + $0x128] sm:$0xff]
  %v53 = vld [vmem:[%s0 + $0x130] sm:$0xff]
  %v54 = vld [vmem:[%s0 + $0x138] sm:$0xff]
  %v55 = vld [vmem:[%s0 + $0x140] sm:$0xff]
  %v56 = vld [vmem:[%s0 + $0x148] sm:$0xff]
  %v57 = vld [vmem:[%s0 + $0x150] sm:$0xff]
  %v58 = vld [vmem:[%s0 + $0x158] sm:$0xff]
  %v59 = vld [vmem:[%s0 + $0x160] sm:$0xff]
  %v60 = vld [vmem:[%s0 + $0x168] sm:$0xff]
  %v61 = vld [vmem:[%s0 + $0x170] sm:$0xff]
  %v62 = vld [vmem:[%s0 + $0x178] sm:$0xff]
  %v63 = vld [vmem:[%s0 + $0x180] sm:$0xff]
  %v64 = vld [vmem:[%s0 + $0x188] sm:$0xff]
  %v65 = vld [vmem:[%s0 + $0x190] sm:$0xff]
  %v66 = vld [vmem:[%s0 + $0x198] sm:$0xff]
  %v67 = vld [vmem:[%s0 + $0x1a0] sm:$0xff]
  %v68 = vld [vmem:[%s0 + $0x1a8] sm:$0xff]
  %v69 = vld [vmem:[%s0 + $0x1b0] sm:$0xff]
  %v70 = vld [vmem:[%s0 + $0x1b8] sm:$0xff]
  %v71 = vld [vmem:[%s0 + $0x1c0] sm:$0xff]
  %v72 = vld [vmem:[%s0 + $0x1c8] sm:$0xff]
  %v73 = vld [vmem:[%s0 + $0x1d0] sm:$0xff]
  %v74 = vld [vmem:[%s0 + $0x1d8] sm:$0xff]
  %v75 = vld [vmem:[%s0 + $0x1e0] sm:$0xff]
  %v76 = vld [vmem:[%s0 + $0x1e8] sm:$0xff]
  %v77 = vld [vmem:[%s0 + $0x1f0] sm:$0xff]
  %v78 = vld [vmem:[%s0 + $0x1f8] sm:$0xff]
  %v79 = vld [vmem:[%s1] sm:$0xf]
  %v80 = vld [vmem:[%s1 + $0x4] sm:$0xf]
  %v81 = vld [vmem:[%s1 + $0x8] sm:$0xf]
  %v82 = vld [vmem:[%s1 + $0xc] sm:$0xf]
  %v83 = vld [vmem:[%s1 + $0x10] sm:$0xf]
  %v84 = vld [vmem:[%s1 + $0x14] sm:$0xf]
  %v85 = vld [vmem:[%s1 + $0x18] sm:$0xf]
  %v86 = vld [vmem:[%s1 + $0x1c] sm:$0xf]
  %v87 = vld [vmem:[%s1 + $0x20] sm:$0xf]
  %v88 = vld [vmem:[%s1 + $0x24] sm:$0xf]
  %v89 = vld [vmem:[%s1 + $0x28] sm:$0xf]
  %v90 = vld [vmem:[%s1 + $0x2c] sm:$0xf]
  %v91 = vld [vmem:[%s1 + $0x30] sm:$0xf]
  %v92 = vld [vmem:[%s1 + $0x34] sm:$0xf]
  %v93 = vld [vmem:[%s1 + $0x38] sm:$0xf]
  %v94 = vld [vmem:[%s1 + $0x3c] sm:$0xf]
  %v95 = vld [vmem:[%s1 + $0x40] sm:$0xf]
  %v96 = vld [vmem:[%s1 + $0x44] sm:$0xf]
  %v97 = vld [vmem:[%s1 + $0x48] sm:$0xf]
  %v98 = vld [vmem:[%s1 + $0x4c] sm:$0xf]
  %v99 = vld [vmem:[%s2] sm:$0x1]
  %v101 = vlaneseq
  %v102 = vshrl.u32 %v101, 7
  %v103 = vsub.s32 0, %v102
  %v104 = vrot.slane %v99, %v103
  %v170 = vunpack.c.l.b16 %v15
  %v171 = vunpack.c.h.b16 %v15
  %v172 = vunpack.c.l.b16 %v16
  %v173 = vunpack.c.h.b16 %v16
  %v174 = vunpack.c.l.b16 %v17
  %v175 = vunpack.c.h.b16 %v17
  %v176 = vunpack.c.l.b16 %v18
  %v177 = vunpack.c.h.b16 %v18
  %v178 = vunpack.c.l.b16 %v19
  %v179 = vunpack.c.h.b16 %v19
  %v180 = vunpack.c.l.b16 %v20
  %v181 = vunpack.c.h.b16 %v20
  %v182 = vunpack.c.l.b16 %v21
  %v183 = vunpack.c.h.b16 %v21
  %v184 = vunpack.c.l.b16 %v22
  %v185 = vunpack.c.h.b16 %v22
  %v186 = vunpack.c.l.b16 %v23
  %v187 = vunpack.c.h.b16 %v23
  %v188 = vunpack.c.l.b16 %v24
  %v189 = vunpack.c.h.b16 %v24
  %v190 = vunpack.c.l.b16 %v25
  %v191 = vunpack.c.h.b16 %v25
  %v192 = vunpack.c.l.b16 %v26
  %v193 = vunpack.c.h.b16 %v26
  %v194 = vunpack.c.l.b16 %v27
  %v195 = vunpack.c.h.b16 %v27
  %v196 = vunpack.c.l.b16 %v28
  %v197 = vunpack.c.h.b16 %v28
  %v198 = vunpack.c.l.b16 %v29
  %v199 = vunpack.c.h.b16 %v29
  %v200 = vunpack.c.l.b16 %v30
  %v201 = vunpack.c.h.b16 %v30
  %v202 = vunpack.c.l.b16 %v31
  %v203 = vunpack.c.h.b16 %v31
  %v204 = vunpack.c.l.b16 %v32
  %v205 = vunpack.c.h.b16 %v32
  %v206 = vunpack.c.l.b16 %v33
  %v207 = vunpack.c.h.b16 %v33
  %v208 = vunpack.c.l.b16 %v34
  %v209 = vunpack.c.h.b16 %v34
  %v210 = vunpack.c.l.b16 %v35
  %v211 = vunpack.c.h.b16 %v35
  %v212 = vunpack.c.l.b16 %v36
  %v213 = vunpack.c.h.b16 %v36
  %v214 = vunpack.c.l.b16 %v37
  %v215 = vunpack.c.h.b16 %v37
  %v216 = vunpack.c.l.b16 %v38
  %v217 = vunpack.c.h.b16 %v38
  %v218 = vunpack.c.l.b16 %v39
  %v219 = vunpack.c.h.b16 %v39
  %v220 = vunpack.c.l.b16 %v40
  %v221 = vunpack.c.h.b16 %v40
  %v222 = vunpack.c.l.b16 %v41
  %v223 = vunpack.c.h.b16 %v41
  %v224 = vunpack.c.l.b16 %v42
  %v225 = vunpack.c.h.b16 %v42
  %v226 = vunpack.c.l.b16 %v43
  %v227 = vunpack.c.h.b16 %v43
  %v228 = vunpack.c.l.b16 %v44
  %v229 = vunpack.c.h.b16 %v44
  %v230 = vunpack.c.l.b16 %v45
  %v231 = vunpack.c.h.b16 %v45
  %v232 = vunpack.c.l.b16 %v46
  %v233 = vunpack.c.h.b16 %v46
  %v234 = vunpack.c.l.b16 %v47
  %v235 = vunpack.c.h.b16 %v47
  %v236 = vunpack.c.l.b16 %v48
  %v237 = vunpack.c.h.b16 %v48
  %v238 = vunpack.c.l.b16 %v49
  %v239 = vunpack.c.h.b16 %v49
  %v240 = vunpack.c.l.b16 %v50
  %v241 = vunpack.c.h.b16 %v50
  %v242 = vunpack.c.l.b16 %v51
  %v243 = vunpack.c.h.b16 %v51
  %v244 = vunpack.c.l.b16 %v52
  %v245 = vunpack.c.h.b16 %v52
  %v246 = vunpack.c.l.b16 %v53
  %v247 = vunpack.c.h.b16 %v53
  %v248 = vunpack.c.l.b16 %v54
  %v249 = vunpack.c.h.b16 %v54
  %v250 = vunpack.c.l.b16 %v55
  %v251 = vunpack.c.h.b16 %v55
  %v252 = vunpack.c.l.b16 %v56
  %v253 = vunpack.c.h.b16 %v56
  %v254 = vunpack.c.l.b16 %v57
  %v255 = vunpack.c.h.b16 %v57
  %v256 = vunpack.c.l.b16 %v58
  %v257 = vunpack.c.h.b16 %v58
  %v258 = vunpack.c.l.b16 %v59
  %v259 = vunpack.c.h.b16 %v59
  %v260 = vunpack.c.l.b16 %v60
  %v261 = vunpack.c.h.b16 %v60
  %v262 = vunpack.c.l.b16 %v61
  %v263 = vunpack.c.h.b16 %v61
  %v264 = vunpack.c.l.b16 %v62
  %v265 = vunpack.c.h.b16 %v62
  %v266 = vunpack.c.l.b16 %v63
  %v267 = vunpack.c.h.b16 %v63
  %v268 = vunpack.c.l.b16 %v64
  %v269 = vunpack.c.h.b16 %v64
  %v270 = vunpack.c.l.b16 %v65
  %v271 = vunpack.c.h.b16 %v65
  %v272 = vunpack.c.l.b16 %v66
  %v273 = vunpack.c.h.b16 %v66
  %v274 = vunpack.c.l.b16 %v67
  %v275 = vunpack.c.h.b16 %v67
  %v276 = vunpack.c.l.b16 %v68
  %v277 = vunpack.c.h.b16 %v68
  %v278 = vunpack.c.l.b16 %v69
  %v279 = vunpack.c.h.b16 %v69
  %v280 = vunpack.c.l.b16 %v70
  %v281 = vunpack.c.h.b16 %v70
  %v282 = vunpack.c.l.b16 %v71
  %v283 = vunpack.c.h.b16 %v71
  %v284 = vunpack.c.l.b16 %v72
  %v285 = vunpack.c.h.b16 %v72
  %v286 = vunpack.c.l.b16 %v73
  %v287 = vunpack.c.h.b16 %v73
  %v288 = vunpack.c.l.b16 %v74
  %v289 = vunpack.c.h.b16 %v74
  %v290 = vunpack.c.l.b16 %v75
  %v291 = vunpack.c.h.b16 %v75
  %v292 = vunpack.c.l.b16 %v76
  %v293 = vunpack.c.h.b16 %v76
  %v294 = vunpack.c.l.b16 %v77
  %v295 = vunpack.c.h.b16 %v77
  %v296 = vunpack.c.l.b16 %v78
  %v297 = vunpack.c.h.b16 %v78
  %v298 = vpack.c.b16 %v172, %v170
  %v299 = vpack.c.b16 %v173, %v171
  %v300 = vpack.c.b16 %v176, %v174
  %v301 = vpack.c.b16 %v177, %v175
  %v302 = vpack.c.b16 %v180, %v178
  %v303 = vpack.c.b16 %v181, %v179
  %v304 = vpack.c.b16 %v184, %v182
  %v305 = vpack.c.b16 %v185, %v183
  %v306 = vpack.c.b16 %v188, %v186
  %v307 = vpack.c.b16 %v189, %v187
  %v308 = vpack.c.b16 %v192, %v190
  %v309 = vpack.c.b16 %v193, %v191
  %v310 = vpack.c.b16 %v196, %v194
  %v311 = vpack.c.b16 %v197, %v195
  %v312 = vpack.c.b16 %v200, %v198
  %v313 = vpack.c.b16 %v201, %v199
  %v314 = vpack.c.b16 %v204, %v202
  %v315 = vpack.c.b16 %v205, %v203
  %v316 = vpack.c.b16 %v208, %v206
  %v317 = vpack.c.b16 %v209, %v207
  %v318 = vpack.c.b16 %v212, %v210
  %v319 = vpack.c.b16 %v213, %v211
  %v320 = vpack.c.b16 %v216, %v214
  %v321 = vpack.c.b16 %v217, %v215
  %v322 = vpack.c.b16 %v220, %v218
  %v323 = vpack.c.b16 %v221, %v219
  %v324 = vpack.c.b16 %v224, %v222
  %v325 = vpack.c.b16 %v225, %v223
  %v326 = vpack.c.b16 %v228, %v226
  %v327 = vpack.c.b16 %v229, %v227
  %v328 = vpack.c.b16 %v232, %v230
  %v329 = vpack.c.b16 %v233, %v231
  %v330 = vpack.c.b16 %v236, %v234
  %v331 = vpack.c.b16 %v237, %v235
  %v332 = vpack.c.b16 %v240, %v238
  %v333 = vpack.c.b16 %v241, %v239
  %v334 = vpack.c.b16 %v244, %v242
  %v335 = vpack.c.b16 %v245, %v243
  %v336 = vpack.c.b16 %v248, %v246
  %v337 = vpack.c.b16 %v249, %v247
  %v338 = vpack.c.b16 %v252, %v250
  %v339 = vpack.c.b16 %v253, %v251
  %v340 = vpack.c.b16 %v256, %v254
  %v341 = vpack.c.b16 %v257, %v255
  %v342 = vpack.c.b16 %v260, %v258
  %v343 = vpack.c.b16 %v261, %v259
  %v344 = vpack.c.b16 %v264, %v262
  %v345 = vpack.c.b16 %v265, %v263
  %v346 = vpack.c.b16 %v268, %v266
  %v347 = vpack.c.b16 %v269, %v267
  %v348 = vpack.c.b16 %v272, %v270
  %v349 = vpack.c.b16 %v273, %v271
  %v350 = vpack.c.b16 %v276, %v274
  %v351 = vpack.c.b16 %v277, %v275
  %v352 = vpack.c.b16 %v280, %v278
  %v353 = vpack.c.b16 %v281, %v279
  %v354 = vpack.c.b16 %v284, %v282
  %v355 = vpack.c.b16 %v285, %v283
  %v356 = vpack.c.b16 %v288, %v286
  %v357 = vpack.c.b16 %v289, %v287
  %v358 = vpack.c.b16 %v292, %v290
  %v359 = vpack.c.b16 %v293, %v291
  %v360 = vpack.c.b16 %v296, %v294
  %v361 = vpack.c.b16 %v297, %v295
  %v414 = vunpack.c.l.b16 %v79
  %v415 = vunpack.c.l.b16 %v80
  %v416 = vunpack.c.l.b16 %v81
  %v417 = vunpack.c.l.b16 %v82
  %v418 = vunpack.c.l.b16 %v83
  %v419 = vunpack.c.l.b16 %v84
  %v420 = vunpack.c.l.b16 %v85
  %v421 = vunpack.c.l.b16 %v86
  %v422 = vunpack.c.l.b16 %v87
  %v423 = vunpack.c.l.b16 %v88
  %v424 = vunpack.c.l.b16 %v89
  %v425 = vunpack.c.l.b16 %v90
  %v426 = vunpack.c.l.b16 %v91
  %v427 = vunpack.c.l.b16 %v92
  %v428 = vunpack.c.l.b16 %v93
  %v429 = vunpack.c.l.b16 %v94
  %v430 = vunpack.c.l.b16 %v95
  %v431 = vunpack.c.l.b16 %v96
  %v432 = vunpack.c.l.b16 %v97
  %v433 = vunpack.c.l.b16 %v98
  %v434 = vpack.c.b16 %v415, %v414
  %v435 = vpack.c.b16 %v417, %v416
  %v436 = vpack.c.b16 %v419, %v418
  %v437 = vpack.c.b16 %v421, %v420
  %v438 = vpack.c.b16 %v423, %v422
  %v439 = vpack.c.b16 %v425, %v424
  %v440 = vpack.c.b16 %v427, %v426
  %v441 = vpack.c.b16 %v429, %v428
  %v442 = vpack.c.b16 %v431, %v430
  %v443 = vpack.c.b16 %v433, %v432
  %vm454 = vcmask 261120
  %v456 = vsel %vm454, %v299, 0
  %v459 = vsel %vm454, %v301, 0
  %v462 = vsel %vm454, %v303, 0
  %v465 = vsel %vm454, %v305, 0
  %v468 = vsel %vm454, %v307, 0
  %v471 = vsel %vm454, %v309, 0
  %v474 = vsel %vm454, %v311, 0
  %v477 = vsel %vm454, %v313, 0
  %v480 = vsel %vm454, %v315, 0
  %v483 = vsel %vm454, %v317, 0
  %v486 = vsel %vm454, %v319, 0
  %v489 = vsel %vm454, %v321, 0
  %v492 = vsel %vm454, %v323, 0
  %v495 = vsel %vm454, %v325, 0
  %v498 = vsel %vm454, %v327, 0
  %v501 = vsel %vm454, %v329, 0
  %v504 = vsel %vm454, %v331, 0
  %v507 = vsel %vm454, %v333, 0
  %v510 = vsel %vm454, %v335, 0
  %v513 = vsel %vm454, %v337, 0
  %v516 = vsel %vm454, %v339, 0
  %v519 = vsel %vm454, %v341, 0
  %v522 = vsel %vm454, %v343, 0
  %v525 = vsel %vm454, %v345, 0
  %v528 = vsel %vm454, %v347, 0
  %v531 = vsel %vm454, %v349, 0
  %v534 = vsel %vm454, %v351, 0
  %v537 = vsel %vm454, %v353, 0
  %v540 = vsel %vm454, %v355, 0
  %v543 = vsel %vm454, %v357, 0
  %v546 = vsel %vm454, %v359, 0
  %v549 = vsel %vm454, %v361, 0
  %551 = vmatprep.subr.bf16.mxu0 0
  %552 = vmatpush1.bf16.msra.mxu0 %v434
  %553 = vmatprep.subr.bf16.mxu0 0
  %554 = vmatpush1.bf16.msra.mxu0 %v435
  %555 = vmatprep.subr.bf16.mxu0 0
  %556 = vmatpush1.bf16.msra.mxu0 %v436
  %557 = vmatprep.subr.bf16.mxu0 0
  %558 = vmatpush1.bf16.msra.mxu0 %v437
  %559 = vmatprep.subr.bf16.mxu0 0
  %560 = vmatpush1.bf16.msra.mxu0 %v438
  %561 = vmatprep.subr.bf16.mxu0 0
  %562 = vmatpush1.bf16.msra.mxu0 %v439
  %563 = vmatprep.subr.bf16.mxu0 0
  %564 = vmatpush1.bf16.msra.mxu0 %v440
  %565 = vmatprep.subr.bf16.mxu0 0
  %566 = vmatpush1.bf16.msra.mxu0 %v441
  %567 = vmatprep.subr.bf16.mxu0 0
  %568 = vmatpush1.bf16.msra.mxu0 %v442
  %569 = vmatprep.subr.bf16.mxu0 0
  %570 = vmatpush1.bf16.msra.mxu0 %v443
  %571 = vmatprep.subr.bf16.mxu0 0
  %572 = vmatpush1.bf16.msra.mxu0 0
  %573 = vmatprep.subr.bf16.mxu0 0
  %574 = vmatpush1.bf16.msra.mxu0 0
  %575 = vmatprep.subr.bf16.mxu0 0
  %576 = vmatpush1.bf16.msra.mxu0 0
  %577 = vmatprep.subr.bf16.mxu0 0
  %578 = vmatpush1.bf16.msra.mxu0 0
  %579 = vmatprep.subr.bf16.mxu0 0
  %580 = vmatpush1.bf16.msra.mxu0 0
  %581 = vmatprep.subr.bf16.mxu0 0
  %582 = vmatpush1.bf16.msra.mxu0 0
  %583 = vmatprep.mubr.bf16.mxu0 %v456
  %584 = vmatmul.mubr.bf16.gmra.mrb[0].mxu0 %v298
  %v585 = vpop.f32.mrb[0].mxu0
  %v586 = vadd.f32 %v104, %v585
  %v587 = vpop.f32.mrb[0].mxu0
  %v588 = vpop.f32.mrb[0].mxu0
  %v589 = vadd.f32 %v104, %v588
  %v590 = vpop.f32.mrb[0].mxu0
  %591 = vmatprep.mubr.bf16.mxu0 %v459
  %592 = vmatmul.mubr.bf16.gmra.mrb[0].mxu0 %v300
  %v593 = vpop.f32.mrb[0].mxu0
  %v594 = vadd.f32 %v104, %v593
  %v595 = vpop.f32.mrb[0].mxu0
  %v596 = vpop.f32.mrb[0].mxu0
  %v597 = vadd.f32 %v104, %v596
  %v598 = vpop.f32.mrb[0].mxu0
  %599 = vmatprep.mubr.bf16.mxu0 %v462
  %600 = vmatmul.mubr.bf16.gmra.mrb[0].mxu0 %v302
  %v601 = vpop.f32.mrb[0].mxu0
  %v602 = vadd.f32 %v104, %v601
  %v603 = vpop.f32.mrb[0].mxu0
  %v604 = vpop.f32.mrb[0].mxu0
  %v605 = vadd.f32 %v104, %v604
  %v606 = vpop.f32.mrb[0].mxu0
  %607 = vmatprep.mubr.bf16.mxu0 %v465
  %608 = vmatmul.mubr.bf16.gmra.mrb[0].mxu0 %v304
  %v609 = vpop.f32.mrb[0].mxu0
  %v610 = vadd.f32 %v104, %v609
  %v611 = vpop.f32.mrb[0].mxu0
  %v612 = vpop.f32.mrb[0].mxu0
  %v613 = vadd.f32 %v104, %v612
  %v614 = vpop.f32.mrb[0].mxu0
  %615 = vmatprep.mubr.bf16.mxu0 %v468
  %616 = vmatmul.mubr.bf16.gmra.mrb[0].mxu0 %v306
  %v617 = vpop.f32.mrb[0].mxu0
  %v618 = vadd.f32 %v104, %v617
  %v619 = vpop.f32.mrb[0].mxu0
  %v620 = vpop.f32.mrb[0].mxu0
  %v621 = vadd.f32 %v104, %v620
  %v622 = vpop.f32.mrb[0].mxu0
  %623 = vmatprep.mubr.bf16.mxu0 %v471
  %624 = vmatmul.mubr.bf16.gmra.mrb[0].mxu0 %v308
  %v625 = vpop.f32.mrb[0].mxu0
  %v626 = vadd.f32 %v104, %v625
  %v627 = vpop.f32.mrb[0].mxu0
  %v628 = vpop.f32.mrb[0].mxu0
  %v629 = vadd.f32 %v104, %v628
  %v630 = vpop.f32.mrb[0].mxu0
  %631 = vmatprep.mubr.bf16.mxu0 %v474
  %632 = vmatmul.mubr.bf16.gmra.mrb[0].mxu0 %v310
  %v633 = vpop.f32.mrb[0].mxu0
  %v634 = vadd.f32 %v104, %v633
  %v635 = vpop.f32.mrb[0].mxu0
  %v636 = vpop.f32.mrb[0].mxu0
  %v637 = vadd.f32 %v104, %v636
  %v638 = vpop.f32.mrb[0].mxu0
  %639 = vmatprep.mubr.bf16.mxu0 %v477
  %640 = vmatmul.mubr.bf16.gmra.mrb[0].mxu0 %v312
  %v641 = vpop.f32.mrb[0].mxu0
  %v642 = vadd.f32 %v104, %v641
  %v643 = vpop.f32.mrb[0].mxu0
  %v644 = vpop.f32.mrb[0].mxu0
  %v645 = vadd.f32 %v104, %v644
  %v646 = vpop.f32.mrb[0].mxu0
  %647 = vmatprep.mubr.bf16.mxu0 %v480
  %648 = vmatmul.mubr.bf16.gmra.mrb[0].mxu0 %v314
  %v649 = vpop.f32.mrb[0].mxu0
  %v650 = vadd.f32 %v104, %v649
  %v651 = vpop.f32.mrb[0].mxu0
  %v652 = vpop.f32.mrb[0].mxu0
  %v653 = vadd.f32 %v104, %v652
  %v654 = vpop.f32.mrb[0].mxu0
  %655 = vmatprep.mubr.bf16.mxu0 %v483
  %656 = vmatmul.mubr.bf16.gmra.mrb[0].mxu0 %v316
  %v657 = vpop.f32.mrb[0].mxu0
  %v658 = vadd.f32 %v104, %v657
  %v659 = vpop.f32.mrb[0].mxu0
  %v660 = vpop.f32.mrb[0].mxu0
  %v661 = vadd.f32 %v104, %v660
  %v662 = vpop.f32.mrb[0].mxu0
  %663 = vmatprep.mubr.bf16.mxu0 %v486
  %664 = vmatmul.mubr.bf16.gmra.mrb[0].mxu0 %v318
  %v665 = vpop.f32.mrb[0].mxu0
  %v666 = vadd.f32 %v104, %v665
  %v667 = vpop.f32.mrb[0].mxu0
  %v668 = vpop.f32.mrb[0].mxu0
  %v669 = vadd.f32 %v104, %v668
  %v670 = vpop.f32.mrb[0].mxu0
  %671 = vmatprep.mubr.bf16.mxu0 %v489
  %672 = vmatmul.mubr.bf16.gmra.mrb[0].mxu0 %v320
  %v673 = vpop.f32.mrb[0].mxu0
  %v674 = vadd.f32 %v104, %v673
  %v675 = vpop.f32.mrb[0].mxu0
  %v676 = vpop.f32.mrb[0].mxu0
  %v677 = vadd.f32 %v104, %v676
  %v678 = vpop.f32.mrb[0].mxu0
  %679 = vmatprep.mubr.bf16.mxu0 %v492
  %680 = vmatmul.mubr.bf16.gmra.mrb[0].mxu0 %v322
  %v681 = vpop.f32.mrb[0].mxu0
  %v682 = vadd.f32 %v104, %v681
  %v683 = vpop.f32.mrb[0].mxu0
  %v684 = vpop.f32.mrb[0].mxu0
  %v685 = vadd.f32 %v104, %v684
  %v686 = vpop.f32.mrb[0].mxu0
  %687 = vmatprep.mubr.bf16.mxu0 %v495
  %688 = vmatmul.mubr.bf16.gmra.mrb[0].mxu0 %v324
  %v689 = vpop.f32.mrb[0].mxu0
  %v690 = vadd.f32 %v104, %v689
  %v691 = vpop.f32.mrb[0].mxu0
  %v692 = vpop.f32.mrb[0].mxu0
  %v693 = vadd.f32 %v104, %v692
  %v694 = vpop.f32.mrb[0].mxu0
  %695 = vmatprep.mubr.bf16.mxu0 %v498
  %696 = vmatmul.mubr.bf16.gmra.mrb[0].mxu0 %v326
  %v697 = vpop.f32.mrb[0].mxu0
  %v698 = vadd.f32 %v104, %v697
  %v699 = vpop.f32.mrb[0].mxu0
  %v700 = vpop.f32.mrb[0].mxu0
  %v701 = vadd.f32 %v104, %v700
  %v702 = vpop.f32.mrb[0].mxu0
  %703 = vmatprep.mubr.bf16.mxu0 %v501
  %704 = vmatmul.mubr.bf16.gmra.mrb[0].mxu0 %v328
  %v705 = vpop.f32.mrb[0].mxu0
  %v706 = vadd.f32 %v104, %v705
  %v707 = vpop.f32.mrb[0].mxu0
  %v708 = vpop.f32.mrb[0].mxu0
  %v709 = vadd.f32 %v104, %v708
  %v710 = vpop.f32.mrb[0].mxu0
  %711 = vmatprep.mubr.bf16.mxu0 %v504
  %712 = vmatmul.mubr.bf16.gmra.mrb[0].mxu0 %v330
  %v713 = vpop.f32.mrb[0].mxu0
  %v714 = vadd.f32 %v104, %v713
  %v715 = vpop.f32.mrb[0].mxu0
  %v716 = vpop.f32.mrb[0].mxu0
  %v717 = vadd.f32 %v104, %v716
  %v718 = vpop.f32.mrb[0].mxu0
  %719 = vmatprep.mubr.bf16.mxu0 %v507
  %720 = vmatmul.mubr.bf16.gmra.mrb[0].mxu0 %v332
  %v721 = vpop.f32.mrb[0].mxu0
  %v722 = vadd.f32 %v104, %v721
  %v723 = vpop.f32.mrb[0].mxu0
  %v724 = vpop.f32.mrb[0].mxu0
  %v725 = vadd.f32 %v104, %v724
  %v726 = vpop.f32.mrb[0].mxu0
  %727 = vmatprep.mubr.bf16.mxu0 %v510
  %728 = vmatmul.mubr.bf16.gmra.mrb[0].mxu0 %v334
  %v729 = vpop.f32.mrb[0].mxu0
  %v730 = vadd.f32 %v104, %v729
  %v731 = vpop.f32.mrb[0].mxu0
  %v732 = vpop.f32.mrb[0].mxu0
  %v733 = vadd.f32 %v104, %v732
  %v734 = vpop.f32.mrb[0].mxu0
  %735 = vmatprep.mubr.bf16.mxu0 %v513
  %736 = vmatmul.mubr.bf16.gmra.mrb[0].mxu0 %v336
  %v737 = vpop.f32.mrb[0].mxu0
  %v738 = vadd.f32 %v104, %v737
  %v739 = vpop.f32.mrb[0].mxu0
  %v740 = vpop.f32.mrb[0].mxu0
  %v741 = vadd.f32 %v104, %v740
  %v742 = vpop.f32.mrb[0].mxu0
  %743 = vmatprep.mubr.bf16.mxu0 %v516
  %744 = vmatmul.mubr.bf16.gmra.mrb[0].mxu0 %v338
  %v745 = vpop.f32.mrb[0].mxu0
  %v746 = vadd.f32 %v104, %v745
  %v747 = vpop.f32.mrb[0].mxu0
  %v748 = vpop.f32.mrb[0].mxu0
  %v749 = vadd.f32 %v104, %v748
  %v750 = vpop.f32.mrb[0].mxu0
  %751 = vmatprep.mubr.bf16.mxu0 %v519
  %752 = vmatmul.mubr.bf16.gmra.mrb[0].mxu0 %v340
  %v753 = vpop.f32.mrb[0].mxu0
  %v754 = vadd.f32 %v104, %v753
  %v755 = vpop.f32.mrb[0].mxu0
  %v756 = vpop.f32.mrb[0].mxu0
  %v757 = vadd.f32 %v104, %v756
  %v758 = vpop.f32.mrb[0].mxu0
  %759 = vmatprep.mubr.bf16.mxu0 %v522
  %760 = vmatmul.mubr.bf16.gmra.mrb[0].mxu0 %v342
  %v761 = vpop.f32.mrb[0].mxu0
  %v762 = vadd.f32 %v104, %v761
  %v763 = vpop.f32.mrb[0].mxu0
  %v764 = vpop.f32.mrb[0].mxu0
  %v765 = vadd.f32 %v104, %v764
  %v766 = vpop.f32.mrb[0].mxu0
  %767 = vmatprep.mubr.bf16.mxu0 %v525
  %768 = vmatmul.mubr.bf16.gmra.mrb[0].mxu0 %v344
  %v769 = vpop.f32.mrb[0].mxu0
  %v770 = vadd.f32 %v104, %v769
  %v771 = vpop.f32.mrb[0].mxu0
  %v772 = vpop.f32.mrb[0].mxu0
  %v773 = vadd.f32 %v104, %v772
  %v774 = vpop.f32.mrb[0].mxu0
  %775 = vmatprep.mubr.bf16.mxu0 %v528
  %776 = vmatmul.mubr.bf16.gmra.mrb[0].mxu0 %v346
  %v777 = vpop.f32.mrb[0].mxu0
  %v778 = vadd.f32 %v104, %v777
  %v779 = vpop.f32.mrb[0].mxu0
  %v780 = vpop.f32.mrb[0].mxu0
  %v781 = vadd.f32 %v104, %v780
  %v782 = vpop.f32.mrb[0].mxu0
  %783 = vmatprep.mubr.bf16.mxu0 %v531
  %784 = vmatmul.mubr.bf16.gmra.mrb[0].mxu0 %v348
  %v785 = vpop.f32.mrb[0].mxu0
  %v786 = vadd.f32 %v104, %v785
  %v787 = vpop.f32.mrb[0].mxu0
  %v788 = vpop.f32.mrb[0].mxu0
  %v789 = vadd.f32 %v104, %v788
  %v790 = vpop.f32.mrb[0].mxu0
  %791 = vmatprep.mubr.bf16.mxu0 %v534
  %792 = vmatmul.mubr.bf16.gmra.mrb[0].mxu0 %v350
  %v793 = vpop.f32.mrb[0].mxu0
  %v794 = vadd.f32 %v104, %v793
  %v795 = vpop.f32.mrb[0].mxu0
  %v796 = vpop.f32.mrb[0].mxu0
  %v797 = vadd.f32 %v104, %v796
  %v798 = vpop.f32.mrb[0].mxu0
  %799 = vmatprep.mubr.bf16.mxu0 %v537
  %800 = vmatmul.mubr.bf16.gmra.mrb[0].mxu0 %v352
  %v801 = vpop.f32.mrb[0].mxu0
  %v802 = vadd.f32 %v104, %v801
  %v803 = vpop.f32.mrb[0].mxu0
  %v804 = vpop.f32.mrb[0].mxu0
  %v805 = vadd.f32 %v104, %v804
  %v806 = vpop.f32.mrb[0].mxu0
  %807 = vmatprep.mubr.bf16.mxu0 %v540
  %808 = vmatmul.mubr.bf16.gmra.mrb[0].mxu0 %v354
  %v809 = vpop.f32.mrb[0].mxu0
  %v810 = vadd.f32 %v104, %v809
  %v811 = vpop.f32.mrb[0].mxu0
  %v812 = vpop.f32.mrb[0].mxu0
  %v813 = vadd.f32 %v104, %v812
  %v814 = vpop.f32.mrb[0].mxu0
  %815 = vmatprep.mubr.bf16.mxu0 %v543
  %816 = vmatmul.mubr.bf16.gmra.mrb[0].mxu0 %v356
  %v817 = vpop.f32.mrb[0].mxu0
  %v818 = vadd.f32 %v104, %v817
  %v819 = vpop.f32.mrb[0].mxu0
  %v820 = vpop.f32.mrb[0].mxu0
  %v821 = vadd.f32 %v104, %v820
  %v822 = vpop.f32.mrb[0].mxu0
  %823 = vmatprep.mubr.bf16.mxu0 %v546
  %824 = vmatmul.mubr.bf16.gmra.mrb[0].mxu0 %v358
  %v825 = vpop.f32.mrb[0].mxu0
  %v826 = vadd.f32 %v104, %v825
  %v827 = vpop.f32.mrb[0].mxu0
  %v828 = vpop.f32.mrb[0].mxu0
  %v829 = vadd.f32 %v104, %v828
  %v830 = vpop.f32.mrb[0].mxu0
  %831 = vmatprep.mubr.bf16.mxu0 %v549
  %832 = vmatmul.mubr.bf16.gmra.mrb[0].mxu0 %v360
  %v833 = vpop.f32.mrb[0].mxu0
  %v834 = vadd.f32 %v104, %v833
  %v835 = vpop.f32.mrb[0].mxu0
  %v836 = vpop.f32.mrb[0].mxu0
  %v837 = vadd.f32 %v104, %v836
  %v838 = vpop.f32.mrb[0].mxu0
  %839 = vdwg.mxu0
  %840 = vst [vmem:[%s3] sm:$0xff] %v586
  %841 = vst [vmem:[%s3 + $0x8] sm:$0xff] %v589
  %842 = vst [vmem:[%s3 + $0x10] sm:$0xff] %v594
  %843 = vst [vmem:[%s3 + $0x18] sm:$0xff] %v597
  %844 = vst [vmem:[%s3 + $0x20] sm:$0xff] %v602
  %845 = vst [vmem:[%s3 + $0x28] sm:$0xff] %v605
  %846 = vst [vmem:[%s3 + $0x30] sm:$0xff] %v610
  %847 = vst [vmem:[%s3 + $0x38] sm:$0xff] %v613
  %848 = vst [vmem:[%s3 + $0x40] sm:$0xff] %v618
  %849 = vst [vmem:[%s3 + $0x48] sm:$0xff] %v621
  %850 = vst [vmem:[%s3 + $0x50] sm:$0xff] %v626
  %851 = vst [vmem:[%s3 + $0x58] sm:$0xff] %v629
  %852 = vst [vmem:[%s3 + $0x60] sm:$0xff] %v634
  %853 = vst [vmem:[%s3 + $0x68] sm:$0xff] %v637
  %854 = vst [vmem:[%s3 + $0x70] sm:$0xff] %v642
  %855 = vst [vmem:[%s3 + $0x78] sm:$0xff] %v645
  %856 = vst [vmem:[%s3 + $0x80] sm:$0xff] %v650
  %857 = vst [vmem:[%s3 + $0x88] sm:$0xff] %v653
  %858 = vst [vmem:[%s3 + $0x90] sm:$0xff] %v658
  %859 = vst [vmem:[%s3 + $0x98] sm:$0xff] %v661
  %860 = vst [vmem:[%s3 + $0xa0] sm:$0xff] %v666
  %861 = vst [vmem:[%s3 + $0xa8] sm:$0xff] %v669
  %862 = vst [vmem:[%s3 + $0xb0] sm:$0xff] %v674
  %863 = vst [vmem:[%s3 + $0xb8] sm:$0xff] %v677
  %864 = vst [vmem:[%s3 + $0xc0] sm:$0xff] %v682
  %865 = vst [vmem:[%s3 + $0xc8] sm:$0xff] %v685
  %866 = vst [vmem:[%s3 + $0xd0] sm:$0xff] %v690
  %867 = vst [vmem:[%s3 + $0xd8] sm:$0xff] %v693
  %868 = vst [vmem:[%s3 + $0xe0] sm:$0xff] %v698
  %869 = vst [vmem:[%s3 + $0xe8] sm:$0xff] %v701
  %870 = vst [vmem:[%s3 + $0xf0] sm:$0xff] %v706
  %871 = vst [vmem:[%s3 + $0xf8] sm:$0xff] %v709
  %872 = vst [vmem:[%s3 + $0x100] sm:$0xff] %v714
  %873 = vst [vmem:[%s3 + $0x108] sm:$0xff] %v717
  %874 = vst [vmem:[%s3 + $0x110] sm:$0xff] %v722
  %875 = vst [vmem:[%s3 + $0x118] sm:$0xff] %v725
  %876 = vst [vmem:[%s3 + $0x120] sm:$0xff] %v730
  %877 = vst [vmem:[%s3 + $0x128] sm:$0xff] %v733
  %878 = vst [vmem:[%s3 + $0x130] sm:$0xff] %v738
  %879 = vst [vmem:[%s3 + $0x138] sm:$0xff] %v741
  %880 = vst [vmem:[%s3 + $0x140] sm:$0xff] %v746
  %881 = vst [vmem:[%s3 + $0x148] sm:$0xff] %v749
  %882 = vst [vmem:[%s3 + $0x150] sm:$0xff] %v754
  %883 = vst [vmem:[%s3 + $0x158] sm:$0xff] %v757
  %884 = vst [vmem:[%s3 + $0x160] sm:$0xff] %v762
  %885 = vst [vmem:[%s3 + $0x168] sm:$0xff] %v765
  %886 = vst [vmem:[%s3 + $0x170] sm:$0xff] %v770
  %887 = vst [vmem:[%s3 + $0x178] sm:$0xff] %v773
  %888 = vst [vmem:[%s3 + $0x180] sm:$0xff] %v778
  %889 = vst [vmem:[%s3 + $0x188] sm:$0xff] %v781
  %890 = vst [vmem:[%s3 + $0x190] sm:$0xff] %v786
  %891 = vst [vmem:[%s3 + $0x198] sm:$0xff] %v789
  %892 = vst [vmem:[%s3 + $0x1a0] sm:$0xff] %v794
  %893 = vst [vmem:[%s3 + $0x1a8] sm:$0xff] %v797
  %894 = vst [vmem:[%s3 + $0x1b0] sm:$0xff] %v802
  %895 = vst [vmem:[%s3 + $0x1b8] sm:$0xff] %v805
  %896 = vst [vmem:[%s3 + $0x1c0] sm:$0xff] %v810
  %897 = vst [vmem:[%s3 + $0x1c8] sm:$0xff] %v813
  %898 = vst [vmem:[%s3 + $0x1d0] sm:$0xff] %v818
  %899 = vst [vmem:[%s3 + $0x1d8] sm:$0xff] %v821
  %900 = vst [vmem:[%s3 + $0x1e0] sm:$0xff] %v826
  %901 = vst [vmem:[%s3 + $0x1e8] sm:$0xff] %v829
  %902 = vst [vmem:[%s3 + $0x1f0] sm:$0xff] %v834
  %903 = vst [vmem:[%s3 + $0x1f8] sm:$0xff] %v837
  // Predicated region
  $region14: #{discriminator_forward.6} parent=0 // pred_check
    _
  $region15: #{discriminator_forward.6} parent=0 // pred_check_branch
    %905 = sbr.rel (0) target = $region17
  $region16: #{discriminator_forward.6} parent=0 // pred_region
    _
  $region17: #{discriminator_forward.6} parent=0 // pred_fallthru
    _
  // Predicated region
  $region18: #{discriminator_forward.6} parent=0 // pred_check
    _
  $region19: #{discriminator_forward.6} parent=0 // pred_check_branch
    %907 = sbr.rel (0) target = $region21
  $region20: #{discriminator_forward.6} parent=0 // pred_region
    _
  $region21: #{discriminator_forward.6} parent=0 // pred_fallthru
    _

// kernel: discriminator_forward.7
$region0: #{discriminator_forward.7}
  #allocation0 [shape = 'u32[]', space=smem, size = 0x4, offset = 0x4, fixed_abs, tag = 'smem constant byte address 0x4 - core index']
  #allocation1 [shape = 'u32[144,128]{1,0:T(1,128)}', space=vmem, size = 0x12000, scoped, tag = 'internal scratch']
  %s0 = inlined_call_operand.vmem [shape: bf16[128,128], index: 0, kind: input, shape index: {}]
  %s1 = inlined_call_operand.vmem [shape: bf16[128,128], index: 1, kind: input, shape index: {}]
  %s2 = inlined_call_operand.vmem [shape: f32[1,128], index: 2, kind: input, shape index: {}]
  %s3 = inlined_call_operand.vmem [shape: f32[128,128], index: 3, kind: output, shape index: {}]
  %s4 = sld [smem:[#allocation0]]
  $region22: #{discriminator_forward.7} parent=0
    _
  %s6 = ssub.s32 1, %s4
  %s7 = scalar_select 0, %s6, %s4
  // Predicated region
  $region2: #{discriminator_forward.7} parent=0 // pred_check
    _
  $region3: #{discriminator_forward.7} parent=0 // pred_check_branch
    %9 = sbr.rel (0) target = $region5
  $region4: #{discriminator_forward.7} parent=0 // pred_region
    _
  $region5: #{discriminator_forward.7} parent=0 // pred_fallthru
    _
  // Predicated region
  $region6: #{discriminator_forward.7} parent=0 // pred_check
    _
  $region7: #{discriminator_forward.7} parent=0 // pred_check_branch
    %11 = sbr.rel (0) target = $region9
  $region8: #{discriminator_forward.7} parent=0 // pred_region
    _
  $region9: #{discriminator_forward.7} parent=0 // pred_fallthru
    _
  // Predicated region
  $region10: #{discriminator_forward.7} parent=0 // pred_check
    _
  $region11: #{discriminator_forward.7} parent=0 // pred_check_branch
    %13 = sbr.rel (0) target = $region13
  $region12: #{discriminator_forward.7} parent=0 // pred_region
    _
  $region13: #{discriminator_forward.7} parent=0 // pred_fallthru
    _
  %v15 = vld [vmem:[%s0] sm:$0xf]
  %v16 = vld [vmem:[%s0 + $0x4] sm:$0xf]
  %v17 = vld [vmem:[%s0 + $0x8] sm:$0xf]
  %v18 = vld [vmem:[%s0 + $0xc] sm:$0xf]
  %v19 = vld [vmem:[%s0 + $0x10] sm:$0xf]
  %v20 = vld [vmem:[%s0 + $0x14] sm:$0xf]
  %v21 = vld [vmem:[%s0 + $0x18] sm:$0xf]
  %v22 = vld [vmem:[%s0 + $0x1c] sm:$0xf]
  %v23 = vld [vmem:[%s0 + $0x20] sm:$0xf]
  %v24 = vld [vmem:[%s0 + $0x24] sm:$0xf]
  %v25 = vld [vmem:[%s0 + $0x28] sm:$0xf]
  %v26 = vld [vmem:[%s0 + $0x2c] sm:$0xf]
  %v27 = vld [vmem:[%s0 + $0x30] sm:$0xf]
  %v28 = vld [vmem:[%s0 + $0x34] sm:$0xf]
  %v29 = vld [vmem:[%s0 + $0x38] sm:$0xf]
  %v30 = vld [vmem:[%s0 + $0x3c] sm:$0xf]
  %v31 = vld [vmem:[%s1] sm:$0xf]
  %v32 = vld [vmem:[%s1 + $0x4] sm:$0xf]
  %v33 = vld [vmem:[%s1 + $0x8] sm:$0xf]
  %v34 = vld [vmem:[%s1 + $0xc] sm:$0xf]
  %v35 = vld [vmem:[%s1 + $0x10] sm:$0xf]
  %v36 = vld [vmem:[%s1 + $0x14] sm:$0xf]
  %v37 = vld [vmem:[%s1 + $0x18] sm:$0xf]
  %v38 = vld [vmem:[%s1 + $0x1c] sm:$0xf]
  %v39 = vld [vmem:[%s1 + $0x20] sm:$0xf]
  %v40 = vld [vmem:[%s1 + $0x24] sm:$0xf]
  %v41 = vld [vmem:[%s1 + $0x28] sm:$0xf]
  %v42 = vld [vmem:[%s1 + $0x2c] sm:$0xf]
  %v43 = vld [vmem:[%s1 + $0x30] sm:$0xf]
  %v44 = vld [vmem:[%s1 + $0x34] sm:$0xf]
  %v45 = vld [vmem:[%s1 + $0x38] sm:$0xf]
  %v46 = vld [vmem:[%s1 + $0x3c] sm:$0xf]
  %v47 = vld [vmem:[%s2] sm:$0x1]
  %v49 = vlaneseq
  %v50 = vshrl.u32 %v49, 7
  %v51 = vsub.s32 0, %v50
  %v52 = vrot.slane %v47, %v51
  %v70 = vunpack.c.l.b16 %v15
  %v71 = vunpack.c.l.b16 %v16
  %v72 = vunpack.c.l.b16 %v17
  %v73 = vunpack.c.l.b16 %v18
  %v74 = vunpack.c.l.b16 %v19
  %v75 = vunpack.c.l.b16 %v20
  %v76 = vunpack.c.l.b16 %v21
  %v77 = vunpack.c.l.b16 %v22
  %v78 = vunpack.c.l.b16 %v23
  %v79 = vunpack.c.l.b16 %v24
  %v80 = vunpack.c.l.b16 %v25
  %v81 = vunpack.c.l.b16 %v26
  %v82 = vunpack.c.l.b16 %v27
  %v83 = vunpack.c.l.b16 %v28
  %v84 = vunpack.c.l.b16 %v29
  %v85 = vunpack.c.l.b16 %v30
  %v86 = vpack.c.b16 %v71, %v70
  %v87 = vpack.c.b16 %v73, %v72
  %v88 = vpack.c.b16 %v75, %v74
  %v89 = vpack.c.b16 %v77, %v76
  %v90 = vpack.c.b16 %v79, %v78
  %v91 = vpack.c.b16 %v81, %v80
  %v92 = vpack.c.b16 %v83, %v82
  %v93 = vpack.c.b16 %v85, %v84
  %v118 = vunpack.c.l.b16 %v31
  %v119 = vunpack.c.l.b16 %v32
  %v120 = vunpack.c.l.b16 %v33
  %v121 = vunpack.c.l.b16 %v34
  %v122 = vunpack.c.l.b16 %v35
  %v123 = vunpack.c.l.b16 %v36
  %v124 = vunpack.c.l.b16 %v37
  %v125 = vunpack.c.l.b16 %v38
  %v126 = vunpack.c.l.b16 %v39
  %v127 = vunpack.c.l.b16 %v40
  %v128 = vunpack.c.l.b16 %v41
  %v129 = vunpack.c.l.b16 %v42
  %v130 = vunpack.c.l.b16 %v43
  %v131 = vunpack.c.l.b16 %v44
  %v132 = vunpack.c.l.b16 %v45
  %v133 = vunpack.c.l.b16 %v46
  %v134 = vpack.c.b16 %v119, %v118
  %v135 = vpack.c.b16 %v121, %v120
  %v136 = vpack.c.b16 %v123, %v122
  %v137 = vpack.c.b16 %v125, %v124
  %v138 = vpack.c.b16 %v127, %v126
  %v139 = vpack.c.b16 %v129, %v128
  %v140 = vpack.c.b16 %v131, %v130
  %v141 = vpack.c.b16 %v133, %v132
  %150 = vmatprep.subr.bf16.mxu0 0
  %151 = vmatpush1.bf16.msra.mxu0 %v134
  %152 = vmatprep.subr.bf16.mxu0 0
  %153 = vmatpush1.bf16.msra.mxu0 %v135
  %154 = vmatprep.subr.bf16.mxu0 0
  %155 = vmatpush1.bf16.msra.mxu0 %v136
  %156 = vmatprep.subr.bf16.mxu0 0
  %157 = vmatpush1.bf16.msra.mxu0 %v137
  %158 = vmatprep.subr.bf16.mxu0 0
  %159 = vmatpush1.bf16.msra.mxu0 %v138
  %160 = vmatprep.subr.bf16.mxu0 0
  %161 = vmatpush1.bf16.msra.mxu0 %v139
  %162 = vmatprep.subr.bf16.mxu0 0
  %163 = vmatpush1.bf16.msra.mxu0 %v140
  %164 = vmatprep.subr.bf16.mxu0 0
  %165 = vmatpush1.bf16.msra.mxu0 %v141
  %166 = vmatprep.subr.bf16.mxu0 0
  %167 = vmatpush1.bf16.msra.mxu0 0
  %168 = vmatprep.subr.bf16.mxu0 0
  %169 = vmatpush1.bf16.msra.mxu0 0
  %170 = vmatprep.subr.bf16.mxu0 0
  %171 = vmatpush1.bf16.msra.mxu0 0
  %172 = vmatprep.subr.bf16.mxu0 0
  %173 = vmatpush1.bf16.msra.mxu0 0
  %174 = vmatprep.subr.bf16.mxu0 0
  %175 = vmatpush1.bf16.msra.mxu0 0
  %176 = vmatprep.subr.bf16.mxu0 0
  %177 = vmatpush1.bf16.msra.mxu0 0
  %178 = vmatprep.subr.bf16.mxu0 0
  %179 = vmatpush1.bf16.msra.mxu0 0
  %180 = vmatprep.subr.bf16.mxu0 0
  %181 = vmatpush1.bf16.msra.mxu0 0
  %182 = vmatprep.mubr.bf16.mxu0 0
  %183 = vmatmul.mubr.bf16.gmra.mrb[0].mxu0 %v86
  %v184 = vpop.f32.mrb[0].mxu0
  %v185 = vadd.f32 %v52, %v184
  %v186 = vpop.f32.mrb[0].mxu0
  %v187 = vpop.f32.mrb[0].mxu0
  %v188 = vadd.f32 %v52, %v187
  %v189 = vpop.f32.mrb[0].mxu0
  %190 = vmatprep.mubr.bf16.mxu0 0
  %191 = vmatmul.mubr.bf16.gmra.mrb[0].mxu0 %v87
  %v192 = vpop.f32.mrb[0].mxu0
  %v193 = vadd.f32 %v52, %v192
  %v194 = vpop.f32.mrb[0].mxu0
  %v195 = vpop.f32.mrb[0].mxu0
  %v196 = vadd.f32 %v52, %v195
  %v197 = vpop.f32.mrb[0].mxu0
  %198 = vmatprep.mubr.bf16.mxu0 0
  %199 = vmatmul.mubr.bf16.gmra.mrb[0].mxu0 %v88
  %v200 = vpop.f32.mrb[0].mxu0
  %v201 = vadd.f32 %v52, %v200
  %v202 = vpop.f32.mrb[0].mxu0
  %v203 = vpop.f32.mrb[0].mxu0
  %v204 = vadd.f32 %v52, %v203
  %v205 = vpop.f32.mrb[0].mxu0
  %206 = vmatprep.mubr.bf16.mxu0 0
  %207 = vmatmul.mubr.bf16.gmra.mrb[0].mxu0 %v89
  %v208 = vpop.f32.mrb[0].mxu0
  %v209 = vadd.f32 %v52, %v208
  %v210 = vpop.f32.mrb[0].mxu0
  %v211 = vpop.f32.mrb[0].mxu0
  %v212 = vadd.f32 %v52, %v211
  %v213 = vpop.f32.mrb[0].mxu0
  %214 = vmatprep.mubr.bf16.mxu0 0
  %215 = vmatmul.mubr.bf16.gmra.mrb[0].mxu0 %v90
  %v216 = vpop.f32.mrb[0].mxu0
  %v217 = vadd.f32 %v52, %v216
  %v218 = vpop.f32.mrb[0].mxu0
  %v219 = vpop.f32.mrb[0].mxu0
  %v220 = vadd.f32 %v52, %v219
  %v221 = vpop.f32.mrb[0].mxu0
  %222 = vmatprep.mubr.bf16.mxu0 0
  %223 = vmatmul.mubr.bf16.gmra.mrb[0].mxu0 %v91
  %v224 = vpop.f32.mrb[0].mxu0
  %v225 = vadd.f32 %v52, %v224
  %v226 = vpop.f32.mrb[0].mxu0
  %v227 = vpop.f32.mrb[0].mxu0
  %v228 = vadd.f32 %v52, %v227
  %v229 = vpop.f32.mrb[0].mxu0
  %230 = vmatprep.mubr.bf16.mxu0 0
  %231 = vmatmul.mubr.bf16.gmra.mrb[0].mxu0 %v92
  %v232 = vpop.f32.mrb[0].mxu0
  %v233 = vadd.f32 %v52, %v232
  %v234 = vpop.f32.mrb[0].mxu0
  %v235 = vpop.f32.mrb[0].mxu0
  %v236 = vadd.f32 %v52, %v235
  %v237 = vpop.f32.mrb[0].mxu0
  %238 = vmatprep.mubr.bf16.mxu0 0
  %239 = vmatmul.mubr.bf16.gmra.mrb[0].mxu0 %v93
  %v240 = vpop.f32.mrb[0].mxu0
  %v241 = vadd.f32 %v52, %v240
  %v242 = vpop.f32.mrb[0].mxu0
  %v243 = vpop.f32.mrb[0].mxu0
  %v244 = vadd.f32 %v52, %v243
  %v245 = vpop.f32.mrb[0].mxu0
  %246 = vdwg.mxu0
  %vm247 = vcmp.ge.f32.partialorder %v185, 0.0
  %vm248 = vcmp.ge.f32.partialorder %v188, 0.0
  %vm249 = vcmp.ge.f32.partialorder %v193, 0.0
  %vm250 = vcmp.ge.f32.partialorder %v196, 0.0
  %vm251 = vcmp.ge.f32.partialorder %v201, 0.0
  %vm252 = vcmp.ge.f32.partialorder %v204, 0.0
  %vm253 = vcmp.ge.f32.partialorder %v209, 0.0
  %vm254 = vcmp.ge.f32.partialorder %v212, 0.0
  %vm255 = vcmp.ge.f32.partialorder %v217, 0.0
  %vm256 = vcmp.ge.f32.partialorder %v220, 0.0
  %vm257 = vcmp.ge.f32.partialorder %v225, 0.0
  %vm258 = vcmp.ge.f32.partialorder %v228, 0.0
  %vm259 = vcmp.ge.f32.partialorder %v233, 0.0
  %vm260 = vcmp.ge.f32.partialorder %v236, 0.0
  %vm261 = vcmp.ge.f32.partialorder %v241, 0.0
  %vm262 = vcmp.ge.f32.partialorder %v244, 0.0
  %v263 = vmul.f32 %v185, 0.2
  %v264 = vmul.f32 %v188, 0.2
  %v265 = vmul.f32 %v193, 0.2
  %v266 = vmul.f32 %v196, 0.2
  %v267 = vmul.f32 %v201, 0.2
  %v268 = vmul.f32 %v204, 0.2
  %v269 = vmul.f32 %v209, 0.2
  %v270 = vmul.f32 %v212, 0.2
  %v271 = vmul.f32 %v217, 0.2
  %v272 = vmul.f32 %v220, 0.2
  %v273 = vmul.f32 %v225, 0.2
  %v274 = vmul.f32 %v228, 0.2
  %v275 = vmul.f32 %v233, 0.2
  %v276 = vmul.f32 %v236, 0.2
  %v277 = vmul.f32 %v241, 0.2
  %v278 = vmul.f32 %v244, 0.2
  %v279 = vsel %vm247, %v185, %v263
  %v280 = vsel %vm248, %v188, %v264
  %v281 = vsel %vm249, %v193, %v265
  %v282 = vsel %vm250, %v196, %v266
  %v283 = vsel %vm251, %v201, %v267
  %v284 = vsel %vm252, %v204, %v268
  %v285 = vsel %vm253, %v209, %v269
  %v286 = vsel %vm254, %v212, %v270
  %v287 = vsel %vm255, %v217, %v271
  %v288 = vsel %vm256, %v220, %v272
  %v289 = vsel %vm257, %v225, %v273
  %v290 = vsel %vm258, %v228, %v274
  %v291 = vsel %vm259, %v233, %v275
  %v292 = vsel %vm260, %v236, %v276
  %v293 = vsel %vm261, %v241, %v277
  %v294 = vsel %vm262, %v244, %v278
  %295 = vst [vmem:[%s3] sm:$0xff] %v279
  %296 = vst [vmem:[%s3 + $0x8] sm:$0xff] %v280
  %297 = vst [vmem:[%s3 + $0x10] sm:$0xff] %v281
  %298 = vst [vmem:[%s3 + $0x18] sm:$0xff] %v282
  %299 = vst [vmem:[%s3 + $0x20] sm:$0xff] %v283
  %300 = vst [vmem:[%s3 + $0x28] sm:$0xff] %v284
  %301 = vst [vmem:[%s3 + $0x30] sm:$0xff] %v285
  %302 = vst [vmem:[%s3 + $0x38] sm:$0xff] %v286
  %303 = vst [vmem:[%s3 + $0x40] sm:$0xff] %v287
  %304 = vst [vmem:[%s3 + $0x48] sm:$0xff] %v288
  %305 = vst [vmem:[%s3 + $0x50] sm:$0xff] %v289
  %306 = vst [vmem:[%s3 + $0x58] sm:$0xff] %v290
  %307 = vst [vmem:[%s3 + $0x60] sm:$0xff] %v291
  %308 = vst [vmem:[%s3 + $0x68] sm:$0xff] %v292
  %309 = vst [vmem:[%s3 + $0x70] sm:$0xff] %v293
  %310 = vst [vmem:[%s3 + $0x78] sm:$0xff] %v294
  // Predicated region
  $region14: #{discriminator_forward.7} parent=0 // pred_check
    _
  $region15: #{discriminator_forward.7} parent=0 // pred_check_branch
    %312 = sbr.rel (0) target = $region17
  $region16: #{discriminator_forward.7} parent=0 // pred_region
    _
  $region17: #{discriminator_forward.7} parent=0 // pred_fallthru
    _
  // Predicated region
  $region18: #{discriminator_forward.7} parent=0 // pred_check
    _
  $region19: #{discriminator_forward.7} parent=0 // pred_check_branch
    %314 = sbr.rel (0) target = $region21
  $region20: #{discriminator_forward.7} parent=0 // pred_region
    _
  $region21: #{discriminator_forward.7} parent=0 // pred_fallthru
    _

// kernel: discriminator_forward.9
$region0: #{discriminator_forward.9}
  #allocation0 [shape = 'u32[]', space=smem, size = 0x4, offset = 0x4, fixed_abs, tag = 'smem constant byte address 0x4 - core index']
  #allocation1 [shape = 'u32[144,128]{1,0:T(1,128)}', space=vmem, size = 0x12000, scoped, tag = 'internal scratch']
  %s0 = inlined_call_operand.vmem [shape: f32[2,16,32], index: 0, kind: input, shape index: {}]
  %s1 = inlined_call_operand.vmem [shape: f32[2,16,32], index: 1, kind: output, shape index: {}]
  %s2 = sld [smem:[#allocation0]]
  $region37: #{discriminator_forward.9} parent=0
    _
  %s4 = ssub.s32 1, %s2
  %s5 = scalar_select 0, %s4, %s2
  loop: start=0, step=1, limit=4
  $region2: #{discriminator_forward.9} parent=0 // loop_pre_header
    _
  $region3: #{discriminator_forward.9} parent=0 // loop_header
    %s7 = sphi 0, %s11
    %p8 = scmp.ge.s32.totalorder %s7, 4
    %s14 = sphi 0, %s26
    %s15 = sphi 0, %s22
    %s16 = sphi 0, %s14
    %s17 = sphi 0, %s15
    %s18 = sphi 0, %s16
    %s19 = sphi 0, %s17
    %s31 = sphi 0, %s33
    %s34 = sphi 0, %s31
    %s35 = sphi 0, %s34
    %s51 = sphi 0, %s35
    %s59 = sphi 0, %s61
    %s62 = sphi 0, %s59
    %s63 = sphi 0, %s62
    %s79 = sphi 0, %s63
  $region4: #{discriminator_forward.9} parent=0 // loop_header_branch
    %10 = sbr.rel (%p8) target = $region8
  $region5: #{discriminator_forward.9} parent=0 // loop_body
    %s12 = ssub.s32 %s7, 1
    %s13 = ssub.s32 %s7, 2
    %s20 = sadd.s32 1, %s15
    %p21 = scmp.ge.s32.totalorder %s20, 1
    %s22 = scalar_select %p21, 0, %s20
    %s23 = sadd.s32 1, %s14
    %s24 = scalar_select %p21, %s23, %s14
    %p25 = scmp.ge.s32.totalorder %s24, 2
    %s26 = scalar_select %p25, 0, %s24
    %s27 = ssub.s32 %s14, %s26
    %s28 = ssub.s32 %s15, %s22
    %s29 = sor.u32 %s27, %s28
    %p30 = scmp.eq.s32.totalorder %s29, 0
    %s32 = sadd.s32 %s31, 1
    %s33 = scalar_select %p30, %s31, %s32
    %p36 = pneg %p30
    %p37 = scmp.eq.s32.totalorder %s7, 1
    %p38 = por %p36, %p37
    %p39 = scmp.ne.s32.totalorder %s31, %s34
    %p40 = scmp.eq.s32.totalorder %s7, 0
    %p41 = por %p39, %p40
    %p42 = scmp.ne.s32.totalorder %s31, %s34
    %p43 = scmp.eq.s32.totalorder %s12, 1
    %p44 = por %p42, %p43
    %p45 = scmp.ne.s32.totalorder %s34, %s35
    %p46 = scmp.eq.s32.totalorder %s12, 0
    %p47 = por %p45, %p46
    %p48 = scmp.ne.s32.totalorder %s34, %s35
    %p49 = scmp.eq.s32.totalorder %s13, 1
    %p50 = por %p48, %p49
    %p52 = scmp.ne.s32.totalorder %s35, %s51
    %p53 = scmp.eq.s32.totalorder %s13, 0
    %p54 = por %p52, %p53
    %s55 = ssub.s32 %s14, %s26
    %s56 = ssub.s32 %s15, %s22
    %s57 = sor.u32 %s55, %s56
    %p58 = scmp.eq.s32.totalorder %s57, 0
    %s60 = sadd.s32 %s59, 1
    %s61 = scalar_select %p58, %s59, %s60
    %p64 = pneg %p58
    %p65 = scmp.eq.s32.totalorder %s7, 1
    %p66 = por %p64, %p65
    %p67 = scmp.ne.s32.totalorder %s59, %s62
    %p68 = scmp.eq.s32.totalorder %s7, 0
    %p69 = por %p67, %p68
    %p70 = scmp.ne.s32.totalorder %s59, %s62
    %p71 = scmp.eq.s32.totalorder %s12, 1
    %p72 = por %p70, %p71
    %p73 = scmp.ne.s32.totalorder %s62, %s63
    %p74 = scmp.eq.s32.totalorder %s12, 0
    %p75 = por %p73, %p74
    %p76 = scmp.ne.s32.totalorder %s62, %s63
    %p77 = scmp.eq.s32.totalorder %s13, 1
    %p78 = por %p76, %p77
    %p80 = scmp.ne.s32.totalorder %s63, %s79
    %p81 = scmp.eq.s32.totalorder %s13, 0
    %p82 = por %p80, %p81
    %p83 = scmp.le.s32.totalorder 1, %s7
    %p84 = scmp.lt.s32.totalorder %s7, 3
    %p85 = pnand %p83, %p84
    %p86 = pneg %p85
    // Predicated region
    $region9: #{discriminator_forward.9} parent=5 // pred_check
      _
    $region10: #{discriminator_forward.9} parent=5 // pred_check_branch
      %88 = sbr.rel (%p85) target = $region12
    $region11: #{discriminator_forward.9} parent=5 // pred_region
      %s89 = ssub.s32 %s7, 1
    $region12: #{discriminator_forward.9} parent=5 // pred_fallthru
      _
    %p90 = scmp.lt.s32.totalorder %s7, 2
    // Predicated region
    $region13: #{discriminator_forward.9} parent=5 // pred_check
      %p91 = pneg %p90
    $region14: #{discriminator_forward.9} parent=5 // pred_check_branch
      %93 = sbr.rel (%p91) target = $region16
    $region15: #{discriminator_forward.9} parent=5 // pred_region
      // Predicated region
      $region17: #{discriminator_forward.9} parent=15 // pred_check
        %p94 = pneg %p41
      $region18: #{discriminator_forward.9} parent=15 // pred_check_branch
        %96 = sbr.rel (%p94) target = $region20
      $region19: #{discriminator_forward.9} parent=15 // pred_region
        %p97 = scmp.lt.s32.totalorder %s14, 1
        %s98 = scalar_select %p97, %s14, 1
        %p99 = scmp.lt.s32.totalorder %s15, 0
        %s100 = scalar_select %p99, %s15, 0
        %s101 = smul.addr %s98, 2
        %s102 = sadd.s32 %s100, %s101
        %s103 = smul.addr %s102, 8
        %s104 = scalar_lea.vmem %s0, %s103
      $region20: #{discriminator_forward.9} parent=15 // pred_fallthru
        _
    $region16: #{discriminator_forward.9} parent=5 // pred_fallthru
      _
    %p105 = scmp.le.s32.totalorder 1, %s7
    %p106 = scmp.lt.s32.totalorder %s7, 3
    %p107 = pnand %p105, %p106
    %p108 = pneg %p107
    // Predicated region
    $region21: #{discriminator_forward.9} parent=5 // pred_check
      _
    $region22: #{discriminator_forward.9} parent=5 // pred_check_branch
      %110 = sbr.rel (%p107) target = $region24
    $region23: #{discriminator_forward.9} parent=5 // pred_region
      %s111 = ssub.s32 %s7, 1
      %p112 = scmp.lt.s32.totalorder %s16, 1
      %s113 = scalar_select %p112, %s16, 1
      %p114 = scmp.lt.s32.totalorder %s17, 0
      %s115 = scalar_select %p114, %s17, 0
      %s116 = smul.addr %s113, 2
      %s117 = sadd.s32 %s115, %s116
      %s118 = smul.addr %s117, 8
      %s119 = scalar_lea.vmem %s0, %s118
      %p120 = pneg %p47
      %p121 = pneg %p44
      %p122 = pneg %p75
      %p123 = pneg %p72
      %p124 = scmp.lt.s32.totalorder %s16, 1
      %s125 = scalar_select %p124, %s16, 1
      %p126 = scmp.lt.s32.totalorder %s17, 0
      %s127 = scalar_select %p126, %s17, 0
      %s128 = smul.addr %s125, 2
      %s129 = sadd.s32 %s127, %s128
      %s130 = smul.addr %s129, 8
      %s131 = scalar_lea.vmem %s1, %s130
      %p132 = scmp.lt.s32.totalorder %s16, 1
      %s133 = scalar_select %p132, %s16, 1
      %p134 = scmp.lt.s32.totalorder %s17, 0
      %s135 = scalar_select %p134, %s17, 0
      %s136 = smul.addr %s133, 2
      %s137 = sadd.s32 %s135, %s136
      %s138 = smul.addr %s137, 8
      %s139 = scalar_lea.vmem %s0, %s138
      %p140 = scmp.lt.s32.totalorder %s16, 1
      %s141 = scalar_select %p140, %s16, 1
      %p142 = scmp.lt.s32.totalorder %s17, 0
      %s143 = scalar_select %p142, %s17, 0
      %s144 = smul.addr %s141, 2
      %s145 = sadd.s32 %s143, %s144
      %s146 = smul.addr %s145, 8
      %s147 = scalar_lea.vmem %s1, %s146
      %v148 = vld [vmem:[%s139] sm:$0xff]
      %v149 = vld [vmem:[%s139 + $0x8] sm:$0xff]
      %vm150 = vcmask 261120
      %v151 = vsel %vm150, %v148, 0.0
      %v152 = vsel %vm150, %v149, 0.0
      %v153 = vadd.f32 %v151, %v152
      %v154 = vrot.slane %v153, 4
      %v155 = vadd.f32 %v153, %v154
      %v156 = vrot.slane %v155, 2
      %v157 = vadd.f32 %v155, %v156
      %v158 = vrot.slane %v157, 1
      %v159 = vadd.f32 %v157, %v158
      %v160 = vmul.f32 %v159, 0.0625
      %v161 = vmul.f32 %v148, %v148
      %v162 = vmul.f32 %v149, %v149
      %v163 = vsel %vm150, %v161, 0.0
      %v164 = vsel %vm150, %v162, 0.0
      %v165 = vadd.f32 %v163, %v164
      %v166 = vrot.slane %v165, 4
      %v167 = vadd.f32 %v165, %v166
      %v168 = vrot.slane %v167, 2
      %v169 = vadd.f32 %v167, %v168
      %v170 = vrot.slane %v169, 1
      %v171 = vadd.f32 %v169, %v170
      %v172 = vmul.f32 %v171, 0.0625
      %v173 = vmul.f32 %v160, %v160
      %v174 = vsub.f32 %v172, %v173
      %v175 = vmax.f32 %v174, 0.0
      %v176 = vsub.f32 %v148, %v160
      %v177 = vsub.f32 %v149, %v160
      %v178 = vadd.f32 %v175, 1e-05
      %v179 = vrsqrt.pop %v178
      %v180 = vmul.f32 %v176, %v179
      %v181 = vmul.f32 %v177, %v179
      %vm182 = vcmp.ge.f32.partialorder %v180, 0.0
      %vm183 = vcmp.ge.f32.partialorder %v181, 0.0
      %v184 = vmul.f32 %v180, 0.2
      %v185 = vmul.f32 %v181, 0.2
      %v186 = vsel %vm182, %v180, %v184
      %v187 = vsel %vm183, %v181, %v185
      %188 = vst.msk [vmem:[%s147] sm:$0xff] %vm150, %v186
      %189 = vst.msk [vmem:[%s147 + $0x8] sm:$0xff] %vm150, %v187
      %p190 = scmp.lt.s32.totalorder %s16, 1
      %s191 = scalar_select %p190, %s16, 1
      %p192 = scmp.lt.s32.totalorder %s17, 0
      %s193 = scalar_select %p192, %s17, 0
      %s194 = smul.addr %s191, 2
      %s195 = sadd.s32 %s193, %s194
      %s196 = smul.addr %s195, 8
      %s197 = scalar_lea.vmem %s1, %s196
      // Predicated region
      $region25: #{discriminator_forward.9} parent=23 // pred_check
        %p198 = pneg %p72
      $region26: #{discriminator_forward.9} parent=23 // pred_check_branch
        %200 = sbr.rel (%p198) target = $region28
      $region27: #{discriminator_forward.9} parent=23 // pred_region
        _
      $region28: #{discriminator_forward.9} parent=23 // pred_fallthru
        _
    $region24: #{discriminator_forward.9} parent=5 // pred_fallthru
      _
    %p201 = scmp.le.s32.totalorder 2, %s7
    // Predicated region
    $region29: #{discriminator_forward.9} parent=5 // pred_check
      %p202 = pneg %p201
    $region30: #{discriminator_forward.9} parent=5 // pred_check_branch
      %204 = sbr.rel (%p202) target = $region32
    $region31: #{discriminator_forward.9} parent=5 // pred_region
      %s205 = ssub.s32 %s7, 2
      // Predicated region
      $region33: #{discriminator_forward.9} parent=31 // pred_check
        %p206 = pneg %p78
      $region34: #{discriminator_forward.9} parent=31 // pred_check_branch
        %208 = sbr.rel (%p206) target = $region36
      $region35: #{discriminator_forward.9} parent=31 // pred_region
        %p209 = scmp.lt.s32.totalorder %s18, 1
        %s210 = scalar_select %p209, %s18, 1
        %p211 = scmp.lt.s32.totalorder %s19, 0
        %s212 = scalar_select %p211, %s19, 0
        %s213 = smul.addr %s210, 2
        %s214 = sadd.s32 %s212, %s213
        %s215 = smul.addr %s214, 8
        %s216 = scalar_lea.vmem %s1, %s215
      $region36: #{discriminator_forward.9} parent=31 // pred_fallthru
        _
    $region32: #{discriminator_forward.9} parent=5 // pred_fallthru
      _
  $region6: #{discriminator_forward.9} parent=0 // loop_footer
    %s11 = sadd.s32 1, %s7
  $region7: #{discriminator_forward.9} parent=0 // loop_footer_branch
    %6 = sbr.rel target = $region3
  $region8: #{discriminator_forward.9} parent=0 // loop_exit
    _

// kernel: discriminator_forward.8
$region0: #{discriminator_forward.8}
  #allocation0 [shape = 'u32[]', space=smem, size = 0x4, offset = 0x4, fixed_abs, tag = 'smem constant byte address 0x4 - core index']
  #allocation1 [shape = 'u32[144,128]{1,0:T(1,128)}', space=vmem, size = 0x12000, scoped, tag = 'internal scratch']
  %s0 = inlined_call_operand.vmem [shape: bf16[32,256], index: 0, kind: input, shape index: {}]
  %s1 = inlined_call_operand.vmem [shape: bf16[256,128], index: 1, kind: input, shape index: {}]
  %s2 = inlined_call_operand.vmem [shape: f32[1,128], index: 2, kind: input, shape index: {}]
  %s3 = inlined_call_operand.vmem [shape: f32[32,128], index: 3, kind: output, shape index: {}]
  %s4 = sld [smem:[#allocation0]]
  $region22: #{discriminator_forward.8} parent=0
    _
  %s6 = ssub.s32 1, %s4
  %s7 = scalar_select 0, %s6, %s4
  // Predicated region
  $region2: #{discriminator_forward.8} parent=0 // pred_check
    _
  $region3: #{discriminator_forward.8} parent=0 // pred_check_branch
    %9 = sbr.rel (0) target = $region5
  $region4: #{discriminator_forward.8} parent=0 // pred_region
    _
  $region5: #{discriminator_forward.8} parent=0 // pred_fallthru
    _
  // Predicated region
  $region6: #{discriminator_forward.8} parent=0 // pred_check
    _
  $region7: #{discriminator_forward.8} parent=0 // pred_check_branch
    %11 = sbr.rel (0) target = $region9
  $region8: #{discriminator_forward.8} parent=0 // pred_region
    _
  $region9: #{discriminator_forward.8} parent=0 // pred_fallthru
    _
  // Predicated region
  $region10: #{discriminator_forward.8} parent=0 // pred_check
    _
  $region11: #{discriminator_forward.8} parent=0 // pred_check_branch
    %13 = sbr.rel (0) target = $region13
  $region12: #{discriminator_forward.8} parent=0 // pred_region
    _
  $region13: #{discriminator_forward.8} parent=0 // pred_fallthru
    _
  %v15 = vld [vmem:[%s0] sm:$0xff]
  %v16 = vld [vmem:[%s0 + $0x8] sm:$0xff]
  %v17 = vld [vmem:[%s0 + $0x10] sm:$0xff]
  %v18 = vld [vmem:[%s0 + $0x18] sm:$0xff]
  %v19 = vld [vmem:[%s1] sm:$0xf]
  %v20 = vld [vmem:[%s1 + $0x4] sm:$0xf]
  %v21 = vld [vmem:[%s1 + $0x8] sm:$0xf]
  %v22 = vld [vmem:[%s1 + $0xc] sm:$0xf]
  %v23 = vld [vmem:[%s1 + $0x10] sm:$0xf]
  %v24 = vld [vmem:[%s1 + $0x14] sm:$0xf]
  %v25 = vld [vmem:[%s1 + $0x18] sm:$0xf]
  %v26 = vld [vmem:[%s1 + $0x1c] sm:$0xf]
  %v27 = vld [vmem:[%s1 + $0x20] sm:$0xf]
  %v28 = vld [vmem:[%s1 + $0x24] sm:$0xf]
  %v29 = vld [vmem:[%s1 + $0x28] sm:$0xf]
  %v30 = vld [vmem:[%s1 + $0x2c] sm:$0xf]
  %v31 = vld [vmem:[%s1 + $0x30] sm:$0xf]
  %v32 = vld [vmem:[%s1 + $0x34] sm:$0xf]
  %v33 = vld [vmem:[%s1 + $0x38] sm:$0xf]
  %v34 = vld [vmem:[%s1 + $0x3c] sm:$0xf]
  %v35 = vld [vmem:[%s1 + $0x40] sm:$0xf]
  %v36 = vld [vmem:[%s1 + $0x44] sm:$0xf]
  %v37 = vld [vmem:[%s1 + $0x48] sm:$0xf]
  %v38 = vld [vmem:[%s1 + $0x4c] sm:$0xf]
  %v39 = vld [vmem:[%s1 + $0x50] sm:$0xf]
  %v40 = vld [vmem:[%s1 + $0x54] sm:$0xf]
  %v41 = vld [vmem:[%s1 + $0x58] sm:$0xf]
  %v42 = vld [vmem:[%s1 + $0x5c] sm:$0xf]
  %v43 = vld [vmem:[%s1 + $0x60] sm:$0xf]
  %v44 = vld [vmem:[%s1 + $0x64] sm:$0xf]
  %v45 = vld [vmem:[%s1 + $0x68] sm:$0xf]
  %v46 = vld [vmem:[%s1 + $0x6c] sm:$0xf]
  %v47 = vld [vmem:[%s1 + $0x70] sm:$0xf]
  %v48 = vld [vmem:[%s1 + $0x74] sm:$0xf]
  %v49 = vld [vmem:[%s1 + $0x78] sm:$0xf]
  %v50 = vld [vmem:[%s1 + $0x7c] sm:$0xf]
  %v51 = vld [vmem:[%s2] sm:$0x1]
  %v53 = vlaneseq
  %v54 = vshrl.u32 %v53, 7
  %v55 = vsub.s32 0, %v54
  %v56 = vrot.slane %v51, %v55
  %v62 = vunpack.c.l.b16 %v15
  %v63 = vunpack.c.h.b16 %v15
  %v64 = vunpack.c.l.b16 %v16
  %v65 = vunpack.c.h.b16 %v16
  %v66 = vunpack.c.l.b16 %v17
  %v67 = vunpack.c.h.b16 %v17
  %v68 = vunpack.c.l.b16 %v18
  %v69 = vunpack.c.h.b16 %v18
  %v70 = vpack.c.b16 %v64, %v62
  %v71 = vpack.c.b16 %v65, %v63
  %v72 = vpack.c.b16 %v68, %v66
  %v73 = vpack.c.b16 %v69, %v67
  %v110 = vunpack.c.l.b16 %v19
  %v111 = vunpack.c.l.b16 %v20
  %v112 = vunpack.c.l.b16 %v21
  %v113 = vunpack.c.l.b16 %v22
  %v114 = vunpack.c.l.b16 %v23
  %v115 = vunpack.c.l.b16 %v24
  %v116 = vunpack.c.l.b16 %v25
  %v117 = vunpack.c.l.b16 %v26
  %v118 = vunpack.c.l.b16 %v27
  %v119 = vunpack.c.l.b16 %v28
  %v120 = vunpack.c.l.b16 %v29
  %v121 = vunpack.c.l.b16 %v30
  %v122 = vunpack.c.l.b16 %v31
  %v123 = vunpack.c.l.b16 %v32
  %v124 = vunpack.c.l.b16 %v33
  %v125 = vunpack.c.l.b16 %v34
  %v126 = vunpack.c.l.b16 %v35
  %v127 = vunpack.c.l.b16 %v36
  %v128 = vunpack.c.l.b16 %v37
  %v129 = vunpack.c.l.b16 %v38
  %v130 = vunpack.c.l.b16 %v39
  %v131 = vunpack.c.l.b16 %v40
  %v132 = vunpack.c.l.b16 %v41
  %v133 = vunpack.c.l.b16 %v42
  %v134 = vunpack.c.l.b16 %v43
  %v135 = vunpack.c.l.b16 %v44
  %v136 = vunpack.c.l.b16 %v45
  %v137 = vunpack.c.l.b16 %v46
  %v138 = vunpack.c.l.b16 %v47
  %v139 = vunpack.c.l.b16 %v48
  %v140 = vunpack.c.l.b16 %v49
  %v141 = vunpack.c.l.b16 %v50
  %v142 = vpack.c.b16 %v111, %v110
  %v143 = vpack.c.b16 %v113, %v112
  %v144 = vpack.c.b16 %v115, %v114
  %v145 = vpack.c.b16 %v117, %v116
  %v146 = vpack.c.b16 %v119, %v118
  %v147 = vpack.c.b16 %v121, %v120
  %v148 = vpack.c.b16 %v123, %v122
  %v149 = vpack.c.b16 %v125, %v124
  %v150 = vpack.c.b16 %v127, %v126
  %v151 = vpack.c.b16 %v129, %v128
  %v152 = vpack.c.b16 %v131, %v130
  %v153 = vpack.c.b16 %v133, %v132
  %v154 = vpack.c.b16 %v135, %v134
  %v155 = vpack.c.b16 %v137, %v136
  %v156 = vpack.c.b16 %v139, %v138
  %v157 = vpack.c.b16 %v141, %v140
  %174 = vmatprep.subr.bf16.mxu0 0
  %175 = vmatpush1.bf16.msra.mxu0 %v142
  %176 = vmatprep.subr.bf16.mxu0 0
  %177 = vmatpush1.bf16.msra.mxu0 %v143
  %178 = vmatprep.subr.bf16.mxu0 0
  %179 = vmatpush1.bf16.msra.mxu0 %v144
  %180 = vmatprep.subr.bf16.mxu0 0
  %181 = vmatpush1.bf16.msra.mxu0 %v145
  %182 = vmatprep.subr.bf16.mxu0 0
  %183 = vmatpush1.bf16.msra.mxu0 %v146
  %184 = vmatprep.subr.bf16.mxu0 0
  %185 = vmatpush1.bf16.msra.mxu0 %v147
  %186 = vmatprep.subr.bf16.mxu0 0
  %187 = vmatpush1.bf16.msra.mxu0 %v148
  %188 = vmatprep.subr.bf16.mxu0 0
  %189 = vmatpush1.bf16.msra.mxu0 %v149
  %190 = vmatprep.subr.bf16.mxu0 0
  %191 = vmatpush1.bf16.msra.mxu0 %v150
  %192 = vmatprep.subr.bf16.mxu0 0
  %193 = vmatpush1.bf16.msra.mxu0 %v151
  %194 = vmatprep.subr.bf16.mxu0 0
  %195 = vmatpush1.bf16.msra.mxu0 %v152
  %196 = vmatprep.subr.bf16.mxu0 0
  %197 = vmatpush1.bf16.msra.mxu0 %v153
  %198 = vmatprep.subr.bf16.mxu0 0
  %199 = vmatpush1.bf16.msra.mxu0 %v154
  %200 = vmatprep.subr.bf16.mxu0 0
  %201 = vmatpush1.bf16.msra.mxu0 %v155
  %202 = vmatprep.subr.bf16.mxu0 0
  %203 = vmatpush1.bf16.msra.mxu0 %v156
  %204 = vmatprep.subr.bf16.mxu0 0
  %205 = vmatpush1.bf16.msra.mxu0 %v157
  %206 = vmatprep.mubr.bf16.mxu0 %v71
  %207 = vmatmul.mubr.bf16.gmra.mrb[0].mxu0 %v70
  %v208 = vpop.f32.mrb[0].mxu0
  %v209 = vadd.f32 %v56, %v208
  %v210 = vpop.f32.mrb[0].mxu0
  %v211 = vpop.f32.mrb[0].mxu0
  %v212 = vadd.f32 %v56, %v211
  %v213 = vpop.f32.mrb[0].mxu0
  %214 = vmatprep.mubr.bf16.mxu0 %v73
  %215 = vmatmul.mubr.bf16.gmra.mrb[0].mxu0 %v72
  %v216 = vpop.f32.mrb[0].mxu0
  %v217 = vadd.f32 %v56, %v216
  %v218 = vpop.f32.mrb[0].mxu0
  %v219 = vpop.f32.mrb[0].mxu0
  %v220 = vadd.f32 %v56, %v219
  %v221 = vpop.f32.mrb[0].mxu0
  %222 = vdwg.mxu0
  %223 = vst [vmem:[%s3] sm:$0xff] %v209
  %224 = vst [vmem:[%s3 + $0x8] sm:$0xff] %v212
  %225 = vst [vmem:[%s3 + $0x10] sm:$0xff] %v217
  %226 = vst [vmem:[%s3 + $0x18] sm:$0xff] %v220
  // Predicated region
  $region14: #{discriminator_forward.8} parent=0 // pred_check
    _
  $region15: #{discriminator_forward.8} parent=0 // pred_check_branch
    %228 = sbr.rel (0) target = $region17
  $region16: #{discriminator_forward.8} parent=0 // pred_region
    _
  $region17: #{discriminator_forward.8} parent=0 // pred_fallthru
    _
  // Predicated region
  $region18: #{discriminator_forward.8} parent=0 // pred_check
    _
  $region19: #{discriminator_forward.8} parent=0 // pred_check_branch
    %230 = sbr.rel (0) target = $region21
  $region20: #{discriminator_forward.8} parent=0 // pred_region
    _
  $region21: #{discriminator_forward.8} parent=0 // pred_fallthru
    _

// kernel: discriminator_forward.11
$region0: #{discriminator_forward.11}
  #allocation0 [shape = 'u32[]', space=smem, size = 0x4, offset = 0x4, fixed_abs, tag = 'smem constant byte address 0x4 - core index']
  #allocation1 [shape = 'u32[144,128]{1,0:T(1,128)}', space=vmem, size = 0x12000, scoped, tag = 'internal scratch']
  %s0 = inlined_call_operand.vmem [shape: f32[2,4,64], index: 0, kind: input, shape index: {}]
  %s1 = inlined_call_operand.vmem [shape: bf16[64,128], index: 1, kind: input, shape index: {}]
  %s2 = inlined_call_operand.vmem [shape: f32[1,128], index: 2, kind: input, shape index: {}]
  %s3 = inlined_call_operand.vmem [shape: f32[2,4,128], index: 3, kind: output, shape index: {}]
  %s4 = sld [smem:[#allocation0]]
  $region45: #{discriminator_forward.11} parent=0
    _
  %s6 = ssub.s32 1, %s4
  %s7 = scalar_select 0, %s6, %s4
  loop: start=0, step=1, limit=4
  $region2: #{discriminator_forward.11} parent=0 // loop_pre_header
    _
  $region3: #{discriminator_forward.11} parent=0 // loop_header
    %s9 = sphi 0, %s13
    %p10 = scmp.ge.s32.totalorder %s9, 4
    %s19 = sphi 0, %s21
    %s22 = sphi 0, %s19
    %s23 = sphi 0, %s22
    %s39 = sphi 0, %s23
    %s43 = sphi 0, %s43
    %s45 = sphi 0, %s43
    %s46 = sphi 0, %s45
    %s60 = sphi 0, %s46
    %s64 = sphi 0, %s64
    %s66 = sphi 0, %s64
    %s67 = sphi 0, %s66
    %s81 = sphi 0, %s67
    %s87 = sphi 0, %s89
    %s90 = sphi 0, %s87
    %s91 = sphi 0, %s90
    %s107 = sphi 0, %s91
  $region4: #{discriminator_forward.11} parent=0 // loop_header_branch
    %12 = sbr.rel (%p10) target = $region8
  $region5: #{discriminator_forward.11} parent=0 // loop_body
    %s14 = ssub.s32 %s9, 1
    %s15 = ssub.s32 %s9, 2
    %s16 = sadd.s32 %s9, 1
    %s17 = ssub.s32 %s9, %s16
    %p18 = scmp.eq.s32.totalorder %s17, 0
    %s20 = sadd.s32 %s19, 1
    %s21 = scalar_select %p18, %s19, %s20
    %p24 = pneg %p18
    %p25 = scmp.eq.s32.totalorder %s9, 1
    %p26 = por %p24, %p25
    %p27 = scmp.ne.s32.totalorder %s19, %s22
    %p28 = scmp.eq.s32.totalorder %s9, 0
    %p29 = por %p27, %p28
    %p30 = scmp.ne.s32.totalorder %s19, %s22
    %p31 = scmp.eq.s32.totalorder %s14, 1
    %p32 = por %p30, %p31
    %p33 = scmp.ne.s32.totalorder %s22, %s23
    %p34 = scmp.eq.s32.totalorder %s14, 0
    %p35 = por %p33, %p34
    %p36 = scmp.ne.s32.totalorder %s22, %s23
    %p37 = scmp.eq.s32.totalorder %s15, 1
    %p38 = por %p36, %p37
    %p40 = scmp.ne.s32.totalorder %s23, %s39
    %p41 = scmp.eq.s32.totalorder %s15, 0
    %p42 = por %p40, %p41
    %s44 = sadd.s32 %s43, 1
    %p47 = scmp.eq.s32.totalorder %s9, 1
    %p48 = scmp.ne.s32.totalorder %s43, %s45
    %p49 = scmp.eq.s32.totalorder %s9, 0
    %p50 = por %p48, %p49
    %p51 = scmp.ne.s32.totalorder %s43, %s45
    %p52 = scmp.eq.s32.totalorder %s14, 1
    %p53 = por %p51, %p52
    %p54 = scmp.ne.s32.totalorder %s45, %s46
    %p55 = scmp.eq.s32.totalorder %s14, 0
    %p56 = por %p54, %p55
    %p57 = scmp.ne.s32.totalorder %s45, %s46
    %p58 = scmp.eq.s32.totalorder %s15, 1
    %p59 = por %p57, %p58
    %p61 = scmp.ne.s32.totalorder %s46, %s60
    %p62 = scmp.eq.s32.totalorder %s15, 0
    %p63 = por %p61, %p62
    %s65 = sadd.s32 %s64, 1
    %p68 = scmp.eq.s32.totalorder %s9, 1
    %p69 = scmp.ne.s32.totalorder %s64, %s66
    %p70 = scmp.eq.s32.totalorder %s9, 0
    %p71 = por %p69, %p70
    %p72 = scmp.ne.s32.totalorder %s64, %s66
    %p73 = scmp.eq.s32.totalorder %s14, 1
    %p74 = por %p72, %p73
    %p75 = scmp.ne.s32.totalorder %s66, %s67
    %p76 = scmp.eq.s32.totalorder %s14, 0
    %p77 = por %p75, %p76
    %p78 = scmp.ne.s32.totalorder %s66, %s67
    %p79 = scmp.eq.s32.totalorder %s15, 1
    %p80 = por %p78, %p79
    %p82 = scmp.ne.s32.totalorder %s67, %s81
    %p83 = scmp.eq.s32.totalorder %s15, 0
    %p84 = por %p82, %p83
    %s85 = ssub.s32 %s9, %s16
    %p86 = scmp.eq.s32.totalorder %s85, 0
    %s88 = sadd.s32 %s87, 1
    %s89 = scalar_select %p86, %s87, %s88
    %p92 = pneg %p86
    %p93 = scmp.eq.s32.totalorder %s9, 1
    %p94 = por %p92, %p93
    %p95 = scmp.ne.s32.totalorder %s87, %s90
    %p96 = scmp.eq.s32.totalorder %s9, 0
    %p97 = por %p95, %p96
    %p98 = scmp.ne.s32.totalorder %s87, %s90
    %p99 = scmp.eq.s32.totalorder %s14, 1
    %p100 = por %p98, %p99
    %p101 = scmp.ne.s32.totalorder %s90, %s91
    %p102 = scmp.eq.s32.totalorder %s14, 0
    %p103 = por %p101, %p102
    %p104 = scmp.ne.s32.totalorder %s90, %s91
    %p105 = scmp.eq.s32.totalorder %s15, 1
    %p106 = por %p104, %p105
    %p108 = scmp.ne.s32.totalorder %s91, %s107
    %p109 = scmp.eq.s32.totalorder %s15, 0
    %p110 = por %p108, %p109
    %p111 = scmp.le.s32.totalorder 1, %s9
    %p112 = scmp.lt.s32.totalorder %s9, 3
    %p113 = pnand %p111, %p112
    %p114 = pneg %p113
    // Predicated region
    $region9: #{discriminator_forward.11} parent=5 // pred_check
      _
    $region10: #{discriminator_forward.11} parent=5 // pred_check_branch
      %116 = sbr.rel (%p113) target = $region12
    $region11: #{discriminator_forward.11} parent=5 // pred_region
      %s117 = ssub.s32 %s9, 1
      // Predicated region
      $region13: #{discriminator_forward.11} parent=11 // pred_check
        %p118 = pneg %p56
      $region14: #{discriminator_forward.11} parent=11 // pred_check_branch
        %120 = sbr.rel (%p118) target = $region16
      $region15: #{discriminator_forward.11} parent=11 // pred_region
        _
      $region16: #{discriminator_forward.11} parent=11 // pred_fallthru
        _
      // Predicated region
      $region17: #{discriminator_forward.11} parent=11 // pred_check
        %p121 = pneg %p77
      $region18: #{discriminator_forward.11} parent=11 // pred_check_branch
        %123 = sbr.rel (%p121) target = $region20
      $region19: #{discriminator_forward.11} parent=11 // pred_region
        _
      $region20: #{discriminator_forward.11} parent=11 // pred_fallthru
        _
    $region12: #{discriminator_forward.11} parent=5 // pred_fallthru
      _
    %p124 = scmp.lt.s32.totalorder %s9, 2
    // Predicated region
    $region21: #{discriminator_forward.11} parent=5 // pred_check
      %p125 = pneg %p124
    $region22: #{discriminator_forward.11} parent=5 // pred_check_branch
      %127 = sbr.rel (%p125) target = $region24
    $region23: #{discriminator_forward.11} parent=5 // pred_region
      // Predicated region
      $region25: #{discriminator_forward.11} parent=23 // pred_check
        %p128 = pneg %p29
      $region26: #{discriminator_forward.11} parent=23 // pred_check_branch
        %130 = sbr.rel (%p128) target = $region28
      $region27: #{discriminator_forward.11} parent=23 // pred_region
        %p131 = scmp.lt.s32.totalorder %s9, 1
        %s132 = scalar_select %p131, %s9, 1
        %s133 = smul.addr %s132, 4
        %s134 = scalar_lea.vmem %s0, %s133
      $region28: #{discriminator_forward.11} parent=23 // pred_fallthru
        _
    $region24: #{discriminator_forward.11} parent=5 // pred_fallthru
      _
    %p135 = scmp.le.s32.totalorder 1, %s9
    %p136 = scmp.lt.s32.totalorder %s9, 3
    %p137 = pnand %p135, %p136
    %p138 = pneg %p137
    // Predicated region
    $region29: #{discriminator_forward.11} parent=5 // pred_check
      _
    $region30: #{discriminator_forward.11} parent=5 // pred_check_branch
      %140 = sbr.rel (%p137) target = $region32
    $region31: #{discriminator_forward.11} parent=5 // pred_region
      %s141 = ssub.s32 %s9, 1
      %p142 = scmp.lt.s32.totalorder %s14, 1
      %s143 = scalar_select %p142, %s14, 1
      %s144 = smul.addr %s143, 4
      %s145 = scalar_lea.vmem %s0, %s144
      %p146 = pneg %p35
      %p147 = pneg %p32
      %p148 = pneg %p56
      %p149 = pneg %p53
      %p150 = pneg %p77
      %p151 = pneg %p74
      %p152 = pneg %p103
      %p153 = pneg %p100
      %p154 = scmp.lt.s32.totalorder %s14, 1
      %s155 = scalar_select %p154, %s14, 1
      %s156 = smul.addr %s155, 4
      %s157 = scalar_lea.vmem %s3, %s156
      %p158 = scmp.lt.s32.totalorder %s14, 1
      %s159 = scalar_select %p158, %s14, 1
      %s160 = smul.addr %s159, 4
      %s161 = scalar_lea.vmem %s0, %s160
      %p162 = scmp.lt.s32.totalorder %s14, 1
      %s163 = scalar_select %p162, %s14, 1
      %s164 = smul.addr %s163, 4
      %s165 = scalar_lea.vmem %s3, %s164
      %v167 = vld [vmem:[%s161] sm:$0xf]
      %vm168 = vcmask 519168
      %v169 = vsel %vm168, %v167, 0.0
      %v170 = vrot.slane %v169, 4
      %v171 = vadd.f32 %v169, %v170
      %v172 = vrot.slane %v171, 2
      %v173 = vadd.f32 %v171, %v172
      %v174 = vrot.slane %v173, 1
      %v175 = vadd.f32 %v173, %v174
      %v176 = vmul.f32 %v175, 0.25
      %v177 = vmul.f32 %v167, %v167
      %v178 = vsel %vm168, %v177, 0.0
      %v179 = vrot.slane %v178, 4
      %v180 = vadd.f32 %v178, %v179
      %v181 = vrot.slane %v180, 2
      %v182 = vadd.f32 %v180, %v181
      %v183 = vrot.slane %v182, 1
      %v184 = vadd.f32 %v182, %v183
      %v185 = vmul.f32 %v184, 0.25
      %v186 = vmul.f32 %v176, %v176
      %v187 = vsub.f32 %v185, %v186
      %v188 = vmax.f32 %v187, 0.0
      %v189 = vsub.f32 %v167, %v176
      %v190 = vadd.f32 %v188, 1e-05
      %v191 = vrsqrt.pop %v190
      %v192 = vmul.f32 %v189, %v191
      %vm193 = vcmp.ge.f32.partialorder %v192, 0.0
      %v194 = vmul.f32 %v192, 0.2
      %v195 = vsel %vm193, %v192, %v194
      %v196 = vpack.c.bf16 %v195, %v195
      %v197 = vld [vmem:[%s1] sm:$0xf]
      %v198 = vld [vmem:[%s1 + $0x4] sm:$0xf]
      %v199 = vld [vmem:[%s1 + $0x8] sm:$0xf]
      %v200 = vld [vmem:[%s1 + $0xc] sm:$0xf]
      %v201 = vld [vmem:[%s1 + $0x10] sm:$0xf]
      %v202 = vld [vmem:[%s1 + $0x14] sm:$0xf]
      %v203 = vld [vmem:[%s1 + $0x18] sm:$0xf]
      %v204 = vld [vmem:[%s1 + $0x1c] sm:$0xf]
      %v205 = vld [vmem:[%s2] sm:$0x1]
      %v207 = vlaneseq
      %v208 = vshrl.u32 %v207, 7
      %v209 = vsub.s32 0, %v208
      %v210 = vrot.slane %v205, %v209
      %v220 = vunpack.c.l.b16 %v197
      %v221 = vunpack.c.l.b16 %v198
      %v222 = vunpack.c.l.b16 %v199
      %v223 = vunpack.c.l.b16 %v200
      %v224 = vunpack.c.l.b16 %v201
      %v225 = vunpack.c.l.b16 %v202
      %v226 = vunpack.c.l.b16 %v203
      %v227 = vunpack.c.l.b16 %v204
      %v228 = vpack.c.b16 %v221, %v220
      %v229 = vpack.c.b16 %v223, %v222
      %v230 = vpack.c.b16 %v225, %v224
      %v231 = vpack.c.b16 %v227, %v226
      %vm236 = vcmask 523264
      %v238 = vsel %vm236, %v196, 0
      %240 = vmatprep.subr.bf16.mxu0 0
      %241 = vmatpush1.bf16.msra.mxu0 %v228
      %242 = vmatprep.subr.bf16.mxu0 0
      %243 = vmatpush1.bf16.msra.mxu0 %v229
      %244 = vmatprep.subr.bf16.mxu0 0
      %245 = vmatpush1.bf16.msra.mxu0 %v230
      %246 = vmatprep.subr.bf16.mxu0 0
      %247 = vmatpush1.bf16.msra.mxu0 %v231
      %248 = vmatprep.subr.bf16.mxu0 0
      %249 = vmatpush1.bf16.msra.mxu0 0
      %250 = vmatprep.subr.bf16.mxu0 0
      %251 = vmatpush1.bf16.msra.mxu0 0
      %252 = vmatprep.subr.bf16.mxu0 0
      %253 = vmatpush1.bf16.msra.mxu0 0
      %254 = vmatprep.subr.bf16.mxu0 0
      %255 = vmatpush1.bf16.msra.mxu0 0
      %256 = vmatprep.subr.bf16.mxu0 0
      %257 = vmatpush1.bf16.msra.mxu0 0
      %258 = vmatprep.subr.bf16.mxu0 0
      %259 = vmatpush1.bf16.msra.mxu0 0
      %260 = vmatprep.subr.bf16.mxu0 0
      %261 = vmatpush1.bf16.msra.mxu0 0
      %262 = vmatprep.subr.bf16.mxu0 0
      %263 = vmatpush1.bf16.msra.mxu0 0
      %264 = vmatprep.subr.bf16.mxu0 0
      %265 = vmatpush1.bf16.msra.mxu0 0
      %266 = vmatprep.subr.bf16.mxu0 0
      %267 = vmatpush1.bf16.msra.mxu0 0
      %268 = vmatprep.subr.bf16.mxu0 0
      %269 = vmatpush1.bf16.msra.mxu0 0
      %270 = vmatprep.subr.bf16.mxu0 0
      %271 = vmatpush1.bf16.msra.mxu0 0
      %272 = vmatprep.mubr.bf16.mxu0 0
      %273 = vmatmul.mubr.bf16.gmra.mrb[0].mxu0 %v238
      %v274 = vpop.f32.mrb[0].mxu0
      %v275 = vadd.f32 %v210, %v274
      %v276 = vpop.f32.mrb[0].mxu0
      %v277 = vpop.f32.mrb[0].mxu0
      %v278 = vpop.f32.mrb[0].mxu0
      %279 = vdwg.mxu0
      %280 = vst [vmem:[%s165] sm:$0xf] %v275
      %p281 = scmp.lt.s32.totalorder %s14, 1
      %s282 = scalar_select %p281, %s14, 1
      %s283 = smul.addr %s282, 4
      %s284 = scalar_lea.vmem %s3, %s283
      // Predicated region
      $region33: #{discriminator_forward.11} parent=31 // pred_check
        %p285 = pneg %p100
      $region34: #{discriminator_forward.11} parent=31 // pred_check_branch
        %287 = sbr.rel (%p285) target = $region36
      $region35: #{discriminator_forward.11} parent=31 // pred_region
        _
      $region36: #{discriminator_forward.11} parent=31 // pred_fallthru
        _
    $region32: #{discriminator_forward.11} parent=5 // pred_fallthru
      _
    %p288 = scmp.le.s32.totalorder 2, %s9
    // Predicated region
    $region37: #{discriminator_forward.11} parent=5 // pred_check
      %p289 = pneg %p288
    $region38: #{discriminator_forward.11} parent=5 // pred_check_branch
      %291 = sbr.rel (%p289) target = $region40
    $region39: #{discriminator_forward.11} parent=5 // pred_region
      %s292 = ssub.s32 %s9, 2
      // Predicated region
      $region41: #{discriminator_forward.11} parent=39 // pred_check
        %p293 = pneg %p106
      $region42: #{discriminator_forward.11} parent=39 // pred_check_branch
        %295 = sbr.rel (%p293) target = $region44
      $region43: #{discriminator_forward.11} parent=39 // pred_region
        %p296 = scmp.lt.s32.totalorder %s15, 1
        %s297 = scalar_select %p296, %s15, 1
        %s298 = smul.addr %s297, 4
        %s299 = scalar_lea.vmem %s3, %s298
      $region44: #{discriminator_forward.11} parent=39 // pred_fallthru
        _
    $region40: #{discriminator_forward.11} parent=5 // pred_fallthru
      _
  $region6: #{discriminator_forward.11} parent=0 // loop_footer
    %s13 = sadd.s32 1, %s9
  $region7: #{discriminator_forward.11} parent=0 // loop_footer_branch
    %8 = sbr.rel target = $region3
  $region8: #{discriminator_forward.11} parent=0 // loop_exit
    _

// kernel: discriminator_forward.10
$region0: #{discriminator_forward.10}
  #allocation0 [shape = 'u32[]', space=smem, size = 0x4, offset = 0x4, fixed_abs, tag = 'smem constant byte address 0x4 - core index']
  #allocation1 [shape = 'u32[144,128]{1,0:T(1,128)}', space=vmem, size = 0x12000, scoped, tag = 'internal scratch']
  %s0 = inlined_call_operand.vmem [shape: bf16[16,512], index: 0, kind: input, shape index: {}]
  %s1 = inlined_call_operand.vmem [shape: bf16[512,128], index: 1, kind: input, shape index: {}]
  %s2 = inlined_call_operand.vmem [shape: f32[1,128], index: 2, kind: input, shape index: {}]
  %s3 = inlined_call_operand.vmem [shape: f32[16,128], index: 3, kind: output, shape index: {}]
  %s4 = sld [smem:[#allocation0]]
  $region22: #{discriminator_forward.10} parent=0
    _
  %s6 = ssub.s32 1, %s4
  %s7 = scalar_select 0, %s6, %s4
  // Predicated region
  $region2: #{discriminator_forward.10} parent=0 // pred_check
    _
  $region3: #{discriminator_forward.10} parent=0 // pred_check_branch
    %9 = sbr.rel (0) target = $region5
  $region4: #{discriminator_forward.10} parent=0 // pred_region
    _
  $region5: #{discriminator_forward.10} parent=0 // pred_fallthru
    _
  // Predicated region
  $region6: #{discriminator_forward.10} parent=0 // pred_check
    _
  $region7: #{discriminator_forward.10} parent=0 // pred_check_branch
    %11 = sbr.rel (0) target = $region9
  $region8: #{discriminator_forward.10} parent=0 // pred_region
    _
  $region9: #{discriminator_forward.10} parent=0 // pred_fallthru
    _
  // Predicated region
  $region10: #{discriminator_forward.10} parent=0 // pred_check
    _
  $region11: #{discriminator_forward.10} parent=0 // pred_check_branch
    %13 = sbr.rel (0) target = $region13
  $region12: #{discriminator_forward.10} parent=0 // pred_region
    _
  $region13: #{discriminator_forward.10} parent=0 // pred_fallthru
    _
  %v15 = vld [vmem:[%s0] sm:$0xff]
  %v16 = vld [vmem:[%s0 + $0x8] sm:$0xff]
  %v17 = vld [vmem:[%s0 + $0x10] sm:$0xff]
  %v18 = vld [vmem:[%s0 + $0x18] sm:$0xff]
  %v19 = vld [vmem:[%s1] sm:$0xf]
  %v20 = vld [vmem:[%s1 + $0x4] sm:$0xf]
  %v21 = vld [vmem:[%s1 + $0x8] sm:$0xf]
  %v22 = vld [vmem:[%s1 + $0xc] sm:$0xf]
  %v23 = vld [vmem:[%s1 + $0x10] sm:$0xf]
  %v24 = vld [vmem:[%s1 + $0x14] sm:$0xf]
  %v25 = vld [vmem:[%s1 + $0x18] sm:$0xf]
  %v26 = vld [vmem:[%s1 + $0x1c] sm:$0xf]
  %v27 = vld [vmem:[%s1 + $0x20] sm:$0xf]
  %v28 = vld [vmem:[%s1 + $0x24] sm:$0xf]
  %v29 = vld [vmem:[%s1 + $0x28] sm:$0xf]
  %v30 = vld [vmem:[%s1 + $0x2c] sm:$0xf]
  %v31 = vld [vmem:[%s1 + $0x30] sm:$0xf]
  %v32 = vld [vmem:[%s1 + $0x34] sm:$0xf]
  %v33 = vld [vmem:[%s1 + $0x38] sm:$0xf]
  %v34 = vld [vmem:[%s1 + $0x3c] sm:$0xf]
  %v35 = vld [vmem:[%s1 + $0x40] sm:$0xf]
  %v36 = vld [vmem:[%s1 + $0x44] sm:$0xf]
  %v37 = vld [vmem:[%s1 + $0x48] sm:$0xf]
  %v38 = vld [vmem:[%s1 + $0x4c] sm:$0xf]
  %v39 = vld [vmem:[%s1 + $0x50] sm:$0xf]
  %v40 = vld [vmem:[%s1 + $0x54] sm:$0xf]
  %v41 = vld [vmem:[%s1 + $0x58] sm:$0xf]
  %v42 = vld [vmem:[%s1 + $0x5c] sm:$0xf]
  %v43 = vld [vmem:[%s1 + $0x60] sm:$0xf]
  %v44 = vld [vmem:[%s1 + $0x64] sm:$0xf]
  %v45 = vld [vmem:[%s1 + $0x68] sm:$0xf]
  %v46 = vld [vmem:[%s1 + $0x6c] sm:$0xf]
  %v47 = vld [vmem:[%s1 + $0x70] sm:$0xf]
  %v48 = vld [vmem:[%s1 + $0x74] sm:$0xf]
  %v49 = vld [vmem:[%s1 + $0x78] sm:$0xf]
  %v50 = vld [vmem:[%s1 + $0x7c] sm:$0xf]
  %v51 = vld [vmem:[%s1 + $0x80] sm:$0xf]
  %v52 = vld [vmem:[%s1 + $0x84] sm:$0xf]
  %v53 = vld [vmem:[%s1 + $0x88] sm:$0xf]
  %v54 = vld [vmem:[%s1 + $0x8c] sm:$0xf]
  %v55 = vld [vmem:[%s1 + $0x90] sm:$0xf]
  %v56 = vld [vmem:[%s1 + $0x94] sm:$0xf]
  %v57 = vld [vmem:[%s1 + $0x98] sm:$0xf]
  %v58 = vld [vmem:[%s1 + $0x9c] sm:$0xf]
  %v59 = vld [vmem:[%s1 + $0xa0] sm:$0xf]
  %v60 = vld [vmem:[%s1 + $0xa4] sm:$0xf]
  %v61 = vld [vmem:[%s1 + $0xa8] sm:$0xf]
  %v62 = vld [vmem:[%s1 + $0xac] sm:$0xf]
  %v63 = vld [vmem:[%s1 + $0xb0] sm:$0xf]
  %v64 = vld [vmem:[%s1 + $0xb4] sm:$0xf]
  %v65 = vld [vmem:[%s1 + $0xb8] sm:$0xf]
  %v66 = vld [vmem:[%s1 + $0xbc] sm:$0xf]
  %v67 = vld [vmem:[%s1 + $0xc0] sm:$0xf]
  %v68 = vld [vmem:[%s1 + $0xc4] sm:$0xf]
  %v69 = vld [vmem:[%s1 + $0xc8] sm:$0xf]
  %v70 = vld [vmem:[%s1 + $0xcc] sm:$0xf]
  %v71 = vld [vmem:[%s1 + $0xd0] sm:$0xf]
  %v72 = vld [vmem:[%s1 + $0xd4] sm:$0xf]
  %v73 = vld [vmem:[%s1 + $0xd8] sm:$0xf]
  %v74 = vld [vmem:[%s1 + $0xdc] sm:$0xf]
  %v75 = vld [vmem:[%s1 + $0xe0] sm:$0xf]
  %v76 = vld [vmem:[%s1 + $0xe4] sm:$0xf]
  %v77 = vld [vmem:[%s1 + $0xe8] sm:$0xf]
  %v78 = vld [vmem:[%s1 + $0xec] sm:$0xf]
  %v79 = vld [vmem:[%s1 + $0xf0] sm:$0xf]
  %v80 = vld [vmem:[%s1 + $0xf4] sm:$0xf]
  %v81 = vld [vmem:[%s1 + $0xf8] sm:$0xf]
  %v82 = vld [vmem:[%s1 + $0xfc] sm:$0xf]
  %v83 = vld [vmem:[%s2] sm:$0x1]
  %v85 = vlaneseq
  %v86 = vshrl.u32 %v85, 7
  %v87 = vsub.s32 0, %v86
  %v88 = vrot.slane %v83, %v87
  %v94 = vunpack.c.l.b16 %v15
  %v95 = vunpack.c.h.b16 %v15
  %v96 = vunpack.c.l.b16 %v16
  %v97 = vunpack.c.h.b16 %v16
  %v98 = vunpack.c.l.b16 %v17
  %v99 = vunpack.c.h.b16 %v17
  %v100 = vunpack.c.l.b16 %v18
  %v101 = vunpack.c.h.b16 %v18
  %v102 = vpack.c.b16 %v98, %v94
  %v103 = vpack.c.b16 %v99, %v95
  %v104 = vpack.c.b16 %v100, %v96
  %v105 = vpack.c.b16 %v101, %v97
  %v174 = vunpack.c.l.b16 %v19
  %v175 = vunpack.c.l.b16 %v20
  %v176 = vunpack.c.l.b16 %v21
  %v177 = vunpack.c.l.b16 %v22
  %v178 = vunpack.c.l.b16 %v23
  %v179 = vunpack.c.l.b16 %v24
  %v180 = vunpack.c.l.b16 %v25
  %v181 = vunpack.c.l.b16 %v26
  %v182 = vunpack.c.l.b16 %v27
  %v183 = vunpack.c.l.b16 %v28
  %v184 = vunpack.c.l.b16 %v29
  %v185 = vunpack.c.l.b16 %v30
  %v186 = vunpack.c.l.b16 %v31
  %v187 = vunpack.c.l.b16 %v32
  %v188 = vunpack.c.l.b16 %v33
  %v189 = vunpack.c.l.b16 %v34
  %v190 = vunpack.c.l.b16 %v35
  %v191 = vunpack.c.l.b16 %v36
  %v192 = vunpack.c.l.b16 %v37
  %v193 = vunpack.c.l.b16 %v38
  %v194 = vunpack.c.l.b16 %v39
  %v195 = vunpack.c.l.b16 %v40
  %v196 = vunpack.c.l.b16 %v41
  %v197 = vunpack.c.l.b16 %v42
  %v198 = vunpack.c.l.b16 %v43
  %v199 = vunpack.c.l.b16 %v44
  %v200 = vunpack.c.l.b16 %v45
  %v201 = vunpack.c.l.b16 %v46
  %v202 = vunpack.c.l.b16 %v47
  %v203 = vunpack.c.l.b16 %v48
  %v204 = vunpack.c.l.b16 %v49
  %v205 = vunpack.c.l.b16 %v50
  %v206 = vunpack.c.l.b16 %v51
  %v207 = vunpack.c.l.b16 %v52
  %v208 = vunpack.c.l.b16 %v53
  %v209 = vunpack.c.l.b16 %v54
  %v210 = vunpack.c.l.b16 %v55
  %v211 = vunpack.c.l.b16 %v56
  %v212 = vunpack.c.l.b16 %v57
  %v213 = vunpack.c.l.b16 %v58
  %v214 = vunpack.c.l.b16 %v59
  %v215 = vunpack.c.l.b16 %v60
  %v216 = vunpack.c.l.b16 %v61
  %v217 = vunpack.c.l.b16 %v62
  %v218 = vunpack.c.l.b16 %v63
  %v219 = vunpack.c.l.b16 %v64
  %v220 = vunpack.c.l.b16 %v65
  %v221 = vunpack.c.l.b16 %v66
  %v222 = vunpack.c.l.b16 %v67
  %v223 = vunpack.c.l.b16 %v68
  %v224 = vunpack.c.l.b16 %v69
  %v225 = vunpack.c.l.b16 %v70
  %v226 = vunpack.c.l.b16 %v71
  %v227 = vunpack.c.l.b16 %v72
  %v228 = vunpack.c.l.b16 %v73
  %v229 = vunpack.c.l.b16 %v74
  %v230 = vunpack.c.l.b16 %v75
  %v231 = vunpack.c.l.b16 %v76
  %v232 = vunpack.c.l.b16 %v77
  %v233 = vunpack.c.l.b16 %v78
  %v234 = vunpack.c.l.b16 %v79
  %v235 = vunpack.c.l.b16 %v80
  %v236 = vunpack.c.l.b16 %v81
  %v237 = vunpack.c.l.b16 %v82
  %v238 = vpack.c.b16 %v175, %v174
  %v239 = vpack.c.b16 %v177, %v176
  %v240 = vpack.c.b16 %v179, %v178
  %v241 = vpack.c.b16 %v181, %v180
  %v242 = vpack.c.b16 %v183, %v182
  %v243 = vpack.c.b16 %v185, %v184
  %v244 = vpack.c.b16 %v187, %v186
  %v245 = vpack.c.b16 %v189, %v188
  %v246 = vpack.c.b16 %v191, %v190
  %v247 = vpack.c.b16 %v193, %v192
  %v248 = vpack.c.b16 %v195, %v194
  %v249 = vpack.c.b16 %v197, %v196
  %v250 = vpack.c.b16 %v199, %v198
  %v251 = vpack.c.b16 %v201, %v200
  %v252 = vpack.c.b16 %v203, %v202
  %v253 = vpack.c.b16 %v205, %v204
  %v254 = vpack.c.b16 %v207, %v206
  %v255 = vpack.c.b16 %v209, %v208
  %v256 = vpack.c.b16 %v211, %v210
  %v257 = vpack.c.b16 %v213, %v212
  %v258 = vpack.c.b16 %v215, %v214
  %v259 = vpack.c.b16 %v217, %v216
  %v260 = vpack.c.b16 %v219, %v218
  %v261 = vpack.c.b16 %v221, %v220
  %v262 = vpack.c.b16 %v223, %v222
  %v263 = vpack.c.b16 %v225, %v224
  %v264 = vpack.c.b16 %v227, %v226
  %v265 = vpack.c.b16 %v229, %v228
  %v266 = vpack.c.b16 %v231, %v230
  %v267 = vpack.c.b16 %v233, %v232
  %v268 = vpack.c.b16 %v235, %v234
  %v269 = vpack.c.b16 %v237, %v236
  %302 = vmatprep.subr.bf16.mxu0 0
  %303 = vmatpush1.bf16.msra.mxu0 %v238
  %304 = vmatprep.subr.bf16.mxu0 0
  %305 = vmatpush1.bf16.msra.mxu0 %v239
  %306 = vmatprep.subr.bf16.mxu0 0
  %307 = vmatpush1.bf16.msra.mxu0 %v240
  %308 = vmatprep.subr.bf16.mxu0 0
  %309 = vmatpush1.bf16.msra.mxu0 %v241
  %310 = vmatprep.subr.bf16.mxu0 0
  %311 = vmatpush1.bf16.msra.mxu0 %v242
  %312 = vmatprep.subr.bf16.mxu0 0
  %313 = vmatpush1.bf16.msra.mxu0 %v243
  %314 = vmatprep.subr.bf16.mxu0 0
  %315 = vmatpush1.bf16.msra.mxu0 %v244
  %316 = vmatprep.subr.bf16.mxu0 0
  %317 = vmatpush1.bf16.msra.mxu0 %v245
  %318 = vmatprep.subr.bf16.mxu0 0
  %319 = vmatpush1.bf16.msra.mxu0 %v246
  %320 = vmatprep.subr.bf16.mxu0 0
  %321 = vmatpush1.bf16.msra.mxu0 %v247
  %322 = vmatprep.subr.bf16.mxu0 0
  %323 = vmatpush1.bf16.msra.mxu0 %v248
  %324 = vmatprep.subr.bf16.mxu0 0
  %325 = vmatpush1.bf16.msra.mxu0 %v249
  %326 = vmatprep.subr.bf16.mxu0 0
  %327 = vmatpush1.bf16.msra.mxu0 %v250
  %328 = vmatprep.subr.bf16.mxu0 0
  %329 = vmatpush1.bf16.msra.mxu0 %v251
  %330 = vmatprep.subr.bf16.mxu0 0
  %331 = vmatpush1.bf16.msra.mxu0 %v252
  %332 = vmatprep.subr.bf16.mxu0 0
  %333 = vmatpush1.bf16.msra.mxu0 %v253
  %334 = vmatprep.mubr.bf16.mxu0 %v103
  %335 = vmatmul.mubr.bf16.gmra.mrb[0].mxu0 %v102
  %v336 = vpop.f32.mrb[0].mxu0
  %v337 = vadd.f32 %v88, %v336
  %v338 = vpop.f32.mrb[0].mxu0
  %v339 = vpop.f32.mrb[0].mxu0
  %v340 = vadd.f32 %v88, %v339
  %v341 = vpop.f32.mrb[0].mxu0
  %342 = vdwg.mxu0
  %343 = vmatprep.subr.bf16.mxu0 0
  %344 = vmatpush1.bf16.msra.mxu0 %v254
  %345 = vmatprep.subr.bf16.mxu0 0
  %346 = vmatpush1.bf16.msra.mxu0 %v255
  %347 = vmatprep.subr.bf16.mxu0 0
  %348 = vmatpush1.bf16.msra.mxu0 %v256
  %349 = vmatprep.subr.bf16.mxu0 0
  %350 = vmatpush1.bf16.msra.mxu0 %v257
  %351 = vmatprep.subr.bf16.mxu0 0
  %352 = vmatpush1.bf16.msra.mxu0 %v258
  %353 = vmatprep.subr.bf16.mxu0 0
  %354 = vmatpush1.bf16.msra.mxu0 %v259
  %355 = vmatprep.subr.bf16.mxu0 0
  %356 = vmatpush1.bf16.msra.mxu0 %v260
  %357 = vmatprep.subr.bf16.mxu0 0
  %358 = vmatpush1.bf16.msra.mxu0 %v261
  %359 = vmatprep.subr.bf16.mxu0 0
  %360 = vmatpush1.bf16.msra.mxu0 %v262
  %361 = vmatprep.subr.bf16.mxu0 0
  %362 = vmatpush1.bf16.msra.mxu0 %v263
  %363 = vmatprep.subr.bf16.mxu0 0
  %364 = vmatpush1.bf16.msra.mxu0 %v264
  %365 = vmatprep.subr.bf16.mxu0 0
  %366 = vmatpush1.bf16.msra.mxu0 %v265
  %367 = vmatprep.subr.bf16.mxu0 0
  %368 = vmatpush1.bf16.msra.mxu0 %v266
  %369 = vmatprep.subr.bf16.mxu0 0
  %370 = vmatpush1.bf16.msra.mxu0 %v267
  %371 = vmatprep.subr.bf16.mxu0 0
  %372 = vmatpush1.bf16.msra.mxu0 %v268
  %373 = vmatprep.subr.bf16.mxu0 0
  %374 = vmatpush1.bf16.msra.mxu0 %v269
  %375 = vmatprep.mubr.bf16.mxu0 %v105
  %376 = vmatmul.mubr.bf16.gmra.mrb[0].mxu0 %v104
  %v377 = vpop.f32.mrb[0].mxu0
  %v378 = vadd.f32 %v337, %v377
  %v379 = vpop.f32.mrb[0].mxu0
  %v380 = vpop.f32.mrb[0].mxu0
  %v381 = vadd.f32 %v340, %v380
  %v382 = vpop.f32.mrb[0].mxu0
  %383 = vdwg.mxu0
  %384 = vst [vmem:[%s3] sm:$0xff] %v378
  %385 = vst [vmem:[%s3 + $0x8] sm:$0xff] %v381
  // Predicated region
  $region14: #{discriminator_forward.10} parent=0 // pred_check
    _
  $region15: #{discriminator_forward.10} parent=0 // pred_check_branch
    %387 = sbr.rel (0) target = $region17
  $region16: #{discriminator_forward.10} parent=0 // pred_region
    _
  $region17: #{discriminator_forward.10} parent=0 // pred_fallthru
    _
  // Predicated region
  $region18: #{discriminator_forward.10} parent=0 // pred_check
    _
  $region19: #{discriminator_forward.10} parent=0 // pred_check_branch
    %389 = sbr.rel (0) target = $region21
  $region20: #{discriminator_forward.10} parent=0 // pred_region
    _
  $region21: #{discriminator_forward.10} parent=0 // pred_fallthru
    _

</llo_original>
